<compile_context>
chip_gen: v5e
topology: v5e:2x2
jax: 0.10.0
libtpu: 0.0.40
codegen_flags: <defaults>
</compile_context>

<pallas_src>
import numpy as np
import jax
import jax.numpy as jnp
from jax.experimental import pallas as pl
from jax.experimental.pallas import tpu as pltpu


# ----------------------------------------------------------------------------
# Init-time folding of (bilinear x2, align_corners=False) + (3x3 conv, pad=1, bias)
# ----------------------------------------------------------------------------

def _bilinear_up2_matrix(n):
    """(2n, n) matrix of torch bilinear x2 upsampling with align_corners=False."""
    m = np.zeros((2 * n, n), np.float32)
    for i in range(n):
        # even output row 2i   -> src coord i - 0.25 (clamped at the border)
        m[2 * i, max(i - 1, 0)] += 0.25
        m[2 * i, i] += 0.75
        # odd  output row 2i+1 -> src coord i + 0.25 (clamped at the border)
        m[2 * i + 1, i] += 0.75
        m[2 * i + 1, min(i + 1, n - 1)] += 0.25
    return m


def fold_upsample_conv(w_oihw, bias, H, W, batch):
    """Fold upsample+conv into:
         R_bd     (batch*Hu, 3*batch*H)  f32   block-diag row-upsample+dy finisher
         G        (3, W*Ci, Wu*Co)       bf16  column-upsample x conv(dx, chan-mix)
         bias_row (1, Wu*Co)             f32
    """
    w_np = np.asarray(w_oihw, np.float32)          # torch layout (Co, Ci, 3, 3)
    b_np = np.asarray(bias, np.float32)
    Co, Ci = w_np.shape[0], w_np.shape[1]
    Hu, Wu = 2 * H, 2 * W

    R = _bilinear_up2_matrix(H)                    # (Hu, H)
    Cw = _bilinear_up2_matrix(W)                   # (Wu, W)

    # Zero-padded (conv zero padding) and per-tap shifted row/col operators.
    Rz = np.zeros((Hu + 2, H), np.float32); Rz[1:Hu + 1] = R
    Cz = np.zeros((Wu + 2, W), np.float32); Cz[1:Wu + 1] = Cw
    R_taps = np.stack([Rz[dy:dy + Hu] for dy in range(3)], axis=0)      # (3, Hu, H)

    # G[dy, j*Ci+ci, v*Co+co] = sum_dx Cz[v+dx, j] * w[co, ci, dy, dx]
    G = np.zeros((3, W * Ci, Wu * Co), np.float32)
    for dy in range(3):
        for dx in range(3):
            Ct = Cz[dx:dx + Wu]                                         # (Wu, W)
            contrib = np.einsum('vj,oc->jcvo', Ct, w_np[:, :, dy, dx])  # (W,Ci,Wu,Co)
            G[dy] += contrib.reshape(W * Ci, Wu * Co)

    # Block-diagonal row finisher.  Scratch rows are ordered (dy, b, h); output
    # rows are (b, y):   out[b*Hu+y] = sum_{dy,h} R_taps[dy, y, h] * T[dy, b, h].
    R_bd = np.zeros((batch * Hu, 3 * batch * H), np.float32)
    for b in range(batch):
        for dy in range(3):
            c0 = dy * batch * H + b * H
            R_bd[b * Hu:(b + 1) * Hu, c0:c0 + H] = R_taps[dy]

    bias_row = np.tile(b_np, Wu).reshape(1, Wu * Co)                    # (1, Wu*Co)

    return (jnp.asarray(R_bd, jnp.float32),
            jnp.asarray(G, jnp.bfloat16),
            jnp.asarray(bias_row, jnp.float32))


# ----------------------------------------------------------------------------
# Fused Pallas kernel: one grid step per output-column tile, lane-dense IO
# ----------------------------------------------------------------------------

def _fused_upsample_conv_kernel(xf_ref, rbd_ref, g_ref, bias_ref, o_ref, t_ref):
    # xf_ref  : (B*H, W*Ci)     bf16   batch-folded channels-last input (constant)
    # rbd_ref : (B*Hu, 3*B*H)   f32    block-diag row-upsample finisher (constant)
    # g_ref   : (3, W*Ci, Nt)   bf16   per-dy column operator, current N tile
    # bias_ref: (1, Nt)         f32
    # o_ref   : (B*Hu, Nt)
    # t_ref   : (3*B*H, Nt)     f32    VMEM scratch holding the 3 per-dy partials
    bh = xf_ref.shape[0]
    xf = xf_ref[...]
    for dy in range(3):                                  # unrolled: 3 bf16 MXU dots
        t_ref[dy * bh:(dy + 1) * bh, :] = jnp.dot(
            xf, g_ref[dy], preferred_element_type=jnp.float32)
    out = jnp.dot(rbd_ref[...], t_ref[...], preferred_element_type=jnp.float32)
    o_ref[...] = (out + bias_ref[...]).astype(o_ref.dtype)


@jax.jit
def upsample_forward(x_nchw, R_bd, G, bias_row):
    """Upsample.forward: NCHW in -> NCHW out (B, Ci//2, 2H, 2W)."""
    B, Ci, H, W = x_nchw.shape
    Hu, Wu = 2 * H, 2 * W
    WCi = W * Ci
    N_out = bias_row.shape[1]                 # Wu * Co
    Co = N_out // Wu

    # Stream G / the output in 256-lane column tiles: bounds per-step VMEM, overlaps
    # G's DMA with compute, and gives v7x a parallel axis without duplicating G.
    n_t = N_out // 256 if (N_out % 256 == 0 and N_out >= 512) else 1
    Nt = N_out // n_t

    # TODO(synk): keep activations NHWC end-to-end to make this transpose free.
    xf = jnp.transpose(x_nchw, (0, 2, 3, 1)).reshape(B * H, WCi).astype(jnp.bfloat16)

    cost = pl.CostEstimate(
        flops=2 * 3 * (B * H) * WCi * N_out + 2 * (B * Hu) * (3 * B * H) * N_out,
        transcendentals=0,
        bytes_accessed=(n_t * xf.size * 2 + G.size * 2 + n_t * R_bd.size * 4
                        + bias_row.size * 4 + B * Hu * N_out * 4),
    )

    out_f = pl.pallas_call(
        _fused_upsample_conv_kernel,
        out_shape=jax.ShapeDtypeStruct((B * Hu, N_out), x_nchw.dtype),
        grid=(n_t,),
        in_specs=[
            pl.BlockSpec((B * H, WCi), lambda n: (0, 0)),          # xf   (constant)
            pl.BlockSpec((B * Hu, 3 * B * H), lambda n: (0, 0)),   # R_bd (constant)
            pl.BlockSpec((3, WCi, Nt), lambda n: (0, 0, n)),       # G, streamed per tile
            pl.BlockSpec((1, Nt), lambda n: (0, n)),               # bias tile
        ],
        out_specs=pl.BlockSpec((B * Hu, Nt), lambda n: (0, n)),
        scratch_shapes=[pltpu.VMEM((3 * B * H, Nt), jnp.float32)],
        compiler_params=pltpu.CompilerParams(
            dimension_semantics=("parallel",),
            vmem_limit_bytes=16 * 1024 * 1024,
        ),
        cost_estimate=cost,
    )(xf, R_bd, G, bias_row)

    out = out_f.reshape(B, Hu, Wu, Co)
    # TODO(synk): emit NHWC directly to the next op to avoid this transpose.
    return jnp.transpose(out, (0, 3, 1, 2))


# ----------------------------------------------------------------------------
# Independent reference (explicit bilinear + lax.conv) for a correctness check
# ----------------------------------------------------------------------------

def _bilinear_up2x_ref(x_nhwc):
    def up1d(arr, axis, n):
        idx = jnp.arange(2 * n)
        src = jnp.clip((idx + 0.5) / 2.0 - 0.5, 0.0, n - 1.0)
        lo = jnp.floor(src).astype(jnp.int32)
        hi = jnp.minimum(lo + 1, n - 1)
        frac = (src - lo).astype(arr.dtype)
        shape = [1] * arr.ndim
        shape[axis] = 2 * n
        frac = frac.reshape(shape)
        return jnp.take(arr, lo, axis=axis) * (1 - frac) + jnp.take(arr, hi, axis=axis) * frac

    _, H, W, _ = x_nhwc.shape
    y = up1d(x_nhwc, 1, H)
    y = up1d(y, 2, W)
    return y


if __name__ == "__main__":
    key = jax.random.PRNGKey(0)
    kx, kw, kb = jax.random.split(key, 3)

    # Small shapes: batch=2, n_feat=32, spatial 16x16  ->  output (2, 16, 32, 32).
    B, n_feat, H, W = 2, 32, 16, 16
    x = jax.random.normal(kx, (B, n_feat, H, W), jnp.float32)                    # NCHW
    w = 0.1 * jax.random.normal(kw, (n_feat // 2, n_feat, 3, 3), jnp.float32)    # torch OIHW
    b = 0.1 * jax.random.normal(kb, (n_feat // 2,), jnp.float32)

    R_bd, G, bias_row = fold_upsample_conv(w, b, H, W, B)

    y = upsample_forward(x, R_bd, G, bias_row)
    y = jax.block_until_ready(y)
    assert y.shape == (B, n_feat // 2, 2 * H, 2 * W)

    # Correctness check against an independent (un-folded) f32 reference.
    x_nhwc = jnp.transpose(x, (0, 2, 3, 1))
    up = _bilinear_up2x_ref(x_nhwc)
    ref = jax.lax.conv_general_dilated(
        up, jnp.transpose(w, (2, 3, 1, 0)), (1, 1), ((1, 1), (1, 1)),
        dimension_numbers=("NHWC", "HWIO", "NHWC"),
        precision=jax.lax.Precision.HIGHEST) + b.reshape(1, 1, 1, -1)
    ref = jnp.transpose(ref, (0, 3, 1, 2))
    err = float(jnp.max(jnp.abs(y - ref)))
    # bf16 operators/activations (f32 accumulation) -> relaxed tolerance vs. f32 ref.
    assert err < 6e-2, f"mismatch vs reference: max abs err = {err}"

    print("KERNEL_OK")
</pallas_src>

<mosaic_0001>
module attributes {stable_mosaic.version = 11 : i64} {
  func.func @_fused_upsample_conv_kernel(%arg0: i32, %arg1: memref<32x512xbf16, #tpu.memory_space<vmem>>, %arg2: memref<64x96xf32, #tpu.memory_space<vmem>>, %arg3: memref<3x512x256xbf16, #tpu.memory_space<vmem>>, %arg4: memref<1x256xf32, #tpu.memory_space<vmem>>, %arg5: memref<64x256xf32, #tpu.memory_space<vmem>>, %arg6: memref<96x256xf32, #tpu.memory_space<vmem>>) attributes {dimension_semantics = [#tpu.dimension_semantics<parallel>], iteration_bounds = array<i64: 2>, scalar_prefetch = 0 : i64, scratch_operands = 1 : i64, tpu.core_type = #tpu.core_type<tc>, window_params = [{pipeline_mode = #tpu.pipeline_mode<synchronous>, transform_indices = @transform_0, window_bounds = array<i64: 32, 512>}, {pipeline_mode = #tpu.pipeline_mode<synchronous>, transform_indices = @transform_1, window_bounds = array<i64: 64, 96>}, {transform_indices = @transform_2, window_bounds = array<i64: 3, 512, 256>}, {transform_indices = @transform_3, window_bounds = array<i64: 1, 256>}, {transform_indices = @transform_4, window_bounds = array<i64: 64, 256>}]} {
    %c0 = arith.constant 0 : index
    %c0_0 = arith.constant 0 : index
    %0 = vector.load %arg1[%c0, %c0_0] : memref<32x512xbf16, #tpu.memory_space<vmem>>, vector<32x512xbf16>
    %c0_1 = arith.constant 0 : index
    %c0_2 = arith.constant 0 : index
    %c0_3 = arith.constant 0 : index
    %1 = vector.load %arg3[%c0_1, %c0_2, %c0_3] : memref<3x512x256xbf16, #tpu.memory_space<vmem>>, vector<1x512x256xbf16>
    %2 = vector.shape_cast %1 : vector<1x512x256xbf16> to vector<512x256xbf16>
    %cst = arith.constant dense<0.000000e+00> : vector<32x256xf32>
    %3 = tpu.matmul %0, %2, %cst {dimension_numbers = #tpu.dot_dimension_numbers<[1], [0], [0], [1], [0, 0, 1, 1], [], []>} : vector<32x512xbf16>, vector<512x256xbf16>, vector<32x256xf32> -> vector<32x256xf32>
    %c0_4 = arith.constant 0 : index
    %c0_5 = arith.constant 0 : index
    %4 = vector.load %arg6[%c0_4, %c0_5] : memref<96x256xf32, #tpu.memory_space<vmem>>, vector<32x256xf32>
    tpu.vector_store %arg6[%c0_4, %c0_5], %3 {strides = array<i32>} : memref<96x256xf32, #tpu.memory_space<vmem>>, vector<32x256xf32>,
    %c1 = arith.constant 1 : index
    %c0_6 = arith.constant 0 : index
    %c0_7 = arith.constant 0 : index
    %5 = vector.load %arg3[%c1, %c0_6, %c0_7] : memref<3x512x256xbf16, #tpu.memory_space<vmem>>, vector<1x512x256xbf16>
    %6 = vector.shape_cast %5 : vector<1x512x256xbf16> to vector<512x256xbf16>
    %cst_8 = arith.constant dense<0.000000e+00> : vector<32x256xf32>
    %7 = tpu.matmul %0, %6, %cst_8 {dimension_numbers = #tpu.dot_dimension_numbers<[1], [0], [0], [1], [0, 0, 1, 1], [], []>} : vector<32x512xbf16>, vector<512x256xbf16>, vector<32x256xf32> -> vector<32x256xf32>
    %c32 = arith.constant 32 : index
    %c0_9 = arith.constant 0 : index
    %8 = vector.load %arg6[%c32, %c0_9] : memref<96x256xf32, #tpu.memory_space<vmem>>, vector<32x256xf32>
    tpu.vector_store %arg6[%c32, %c0_9], %7 {strides = array<i32>} : memref<96x256xf32, #tpu.memory_space<vmem>>, vector<32x256xf32>,
    %c2 = arith.constant 2 : index
    %c0_10 = arith.constant 0 : index
    %c0_11 = arith.constant 0 : index
    %9 = vector.load %arg3[%c2, %c0_10, %c0_11] : memref<3x512x256xbf16, #tpu.memory_space<vmem>>, vector<1x512x256xbf16>
    %10 = vector.shape_cast %9 : vector<1x512x256xbf16> to vector<512x256xbf16>
    %cst_12 = arith.constant dense<0.000000e+00> : vector<32x256xf32>
    %11 = tpu.matmul %0, %10, %cst_12 {dimension_numbers = #tpu.dot_dimension_numbers<[1], [0], [0], [1], [0, 0, 1, 1], [], []>} : vector<32x512xbf16>, vector<512x256xbf16>, vector<32x256xf32> -> vector<32x256xf32>
    %c64 = arith.constant 64 : index
    %c0_13 = arith.constant 0 : index
    %12 = vector.load %arg6[%c64, %c0_13] : memref<96x256xf32, #tpu.memory_space<vmem>>, vector<32x256xf32>
    tpu.vector_store %arg6[%c64, %c0_13], %11 {strides = array<i32>} : memref<96x256xf32, #tpu.memory_space<vmem>>, vector<32x256xf32>,
    %c0_14 = arith.constant 0 : index
    %c0_15 = arith.constant 0 : index
    %13 = vector.load %arg2[%c0_14, %c0_15] : memref<64x96xf32, #tpu.memory_space<vmem>>, vector<64x96xf32>
    %c0_16 = arith.constant 0 : index
    %c0_17 = arith.constant 0 : index
    %14 = vector.load %arg6[%c0_16, %c0_17] : memref<96x256xf32, #tpu.memory_space<vmem>>, vector<96x256xf32>
    %cst_18 = arith.constant dense<0.000000e+00> : vector<64x256xf32>
    %15 = tpu.matmul %13, %14, %cst_18 {dimension_numbers = #tpu.dot_dimension_numbers<[1], [0], [0], [1], [0, 0, 1, 1], [], []>} : vector<64x96xf32>, vector<96x256xf32>, vector<64x256xf32> -> vector<64x256xf32>
    %c0_19 = arith.constant 0 : index
    %c0_20 = arith.constant 0 : index
    %16 = vector.load %arg4[%c0_19, %c0_20] : memref<1x256xf32, #tpu.memory_space<vmem>>, vector<1x256xf32>
    %17 = vector.broadcast %16 : vector<1x256xf32> to vector<64x256xf32>
    %18 = arith.addf %15, %17 : vector<64x256xf32>
    %c0_21 = arith.constant 0 : index
    %c0_22 = arith.constant 0 : index
    %19 = vector.load %arg5[%c0_21, %c0_22] : memref<64x256xf32, #tpu.memory_space<vmem>>, vector<64x256xf32>
    tpu.vector_store %arg5[%c0_21, %c0_22], %18 {strides = array<i32>} : memref<64x256xf32, #tpu.memory_space<vmem>>, vector<64x256xf32>,
    return
  }
  func.func @transform_0(%arg0: i32) -> (i32, i32) {
    %c0_i32 = arith.constant 0 : i32
    %c0_i32_0 = arith.constant 0 : i32
    %c0_i32_1 = arith.constant 0 : i32
    return %c0_i32, %c0_i32_0 : i32, i32
  }
  func.func @transform_1(%arg0: i32) -> (i32, i32) {
    %c0_i32 = arith.constant 0 : i32
    %c0_i32_0 = arith.constant 0 : i32
    %c0_i32_1 = arith.constant 0 : i32
    return %c0_i32, %c0_i32_0 : i32, i32
  }
  func.func @transform_2(%arg0: i32) -> (i32, i32, i32) {
    %c0_i32 = arith.constant 0 : i32
    %c0_i32_0 = arith.constant 0 : i32
    %c0_i32_1 = arith.constant 0 : i32
    return %c0_i32, %c0_i32_0, %arg0 : i32, i32, i32
  }
  func.func @transform_3(%arg0: i32) -> (i32, i32) {
    %c0_i32 = arith.constant 0 : i32
    %c0_i32_0 = arith.constant 0 : i32
    return %c0_i32, %arg0 : i32, i32
  }
  func.func @transform_4(%arg0: i32) -> (i32, i32) {
    %c0_i32 = arith.constant 0 : i32
    %c0_i32_0 = arith.constant 0 : i32
    return %c0_i32, %arg0 : i32, i32
  }
}

</mosaic_0001>

<llo_original>
// kernel: upsample_forward.1
$region0: #{upsample_forward.1}
  #allocation0 [shape = 'u32[]', space=smem, size = 0x4, offset = 0x4, fixed_abs, tag = 'smem constant byte address 0x4 - core index']
  #allocation1 [shape = 'u32[72,128]{1,0:T(1,128)}', space=vmem, size = 0x9000, scoped, tag = 'internal scratch']
  #allocation2 [shape = 'f32[96,256]{1,0:T(8,128)}', space=vmem, size = 0x18000, scoped, tag = 'scratch operand']
  %s0 = inlined_call_operand.vmem [shape: bf16[32,512], index: 0, kind: input, shape index: {}]
  %s1 = inlined_call_operand.hbm [shape: f32[64,96], index: 1, kind: input, shape index: {}]
  %s2 = inlined_call_operand.hbm [shape: bf16[3,512,512], index: 2, kind: input, shape index: {}]
  %s3 = inlined_call_operand.hbm [shape: f32[1,512], index: 3, kind: input, shape index: {}]
  %s4 = inlined_call_operand.vmem [shape: f32[64,512], index: 4, kind: output, shape index: {}]
  %s5 = sld [smem:[#allocation0]]
  $region80: #{upsample_forward.1} parent=0
    _
  %s7 = ssub.s32 1, %s5
  %s8 = scalar_select 0, %s7, %s5
  $region1: #{upsample_forward.1} parent=0
    #allocation3 [shape = 'u8[32768]{0}', space=vmem, size = 0x8000, scoped, tag = 'input window, operand 1, single buffered']
    #allocation4 [shape = 's32[2]{0}', space=sflag, size = 0x8, scoped, tag = 'scoped memory for upsample_forward.1']
    #allocation5 [shape = 'u8[1572864]{0}', space=vmem, size = 0x180000, scoped, tag = 'input window, operand 2']
    #allocation6 [shape = 's32[2]{0}', space=sflag, size = 0x8, scoped, tag = 'scoped memory for upsample_forward.1']
    #allocation7 [shape = 'u8[2048]{0}', space=vmem, size = 0x800, scoped, tag = 'input window, operand 3']
    #allocation8 [shape = 'u8[131072]{0}', space=vmem, size = 0x20000, scoped, tag = 'output window, operand 0']
    %9 = vsyncpa [#allocation4], 0
    %10 = vsyncpa [#allocation6], 0
    %s11 = scalar_lea.sflag [#allocation6], 1
    %12 = vsyncpa %s11, 0
    loop: start=0, step=1, limit=4
    $region2: #{upsample_forward.1} parent=1 // loop_pre_header
      _
    $region3: #{upsample_forward.1} parent=1 // loop_header
      %s14 = sphi 0, %s18
      %p15 = scmp.ge.s32.totalorder %s14, 4
      %s22 = sphi 0, %s22
      %s24 = sphi 0, %s22
      %s25 = sphi 0, %s24
      %s39 = sphi 0, %s25
      %s43 = sphi 0, %s43
      %s45 = sphi 0, %s43
      %s46 = sphi 0, %s45
      %s60 = sphi 0, %s46
      %s66 = sphi 0, %s68
      %s69 = sphi 0, %s66
      %s70 = sphi 0, %s69
      %s86 = sphi 0, %s70
      %s92 = sphi 0, %s94
      %s95 = sphi 0, %s92
      %s96 = sphi 0, %s95
      %s112 = sphi 0, %s96
      %s118 = sphi 0, %s120
      %s121 = sphi 0, %s118
      %s122 = sphi 0, %s121
      %s138 = sphi 0, %s122
    $region4: #{upsample_forward.1} parent=1 // loop_header_branch
      %17 = sbr.rel (%p15) target = $region8
    $region5: #{upsample_forward.1} parent=1 // loop_body
      %s19 = ssub.s32 %s14, 1
      %s20 = ssub.s32 %s14, 2
      %s21 = sadd.s32 %s14, 1
      %s23 = sadd.s32 %s22, 1
      %p26 = scmp.eq.s32.totalorder %s14, 1
      %p27 = scmp.ne.s32.totalorder %s22, %s24
      %p28 = scmp.eq.s32.totalorder %s14, 0
      %p29 = por %p27, %p28
      %p30 = scmp.ne.s32.totalorder %s22, %s24
      %p31 = scmp.eq.s32.totalorder %s19, 1
      %p32 = por %p30, %p31
      %p33 = scmp.ne.s32.totalorder %s24, %s25
      %p34 = scmp.eq.s32.totalorder %s19, 0
      %p35 = por %p33, %p34
      %p36 = scmp.ne.s32.totalorder %s24, %s25
      %p37 = scmp.eq.s32.totalorder %s20, 1
      %p38 = por %p36, %p37
      %p40 = scmp.ne.s32.totalorder %s25, %s39
      %p41 = scmp.eq.s32.totalorder %s20, 0
      %p42 = por %p40, %p41
      %s44 = sadd.s32 %s43, 1
      %p47 = scmp.eq.s32.totalorder %s14, 1
      %p48 = scmp.ne.s32.totalorder %s43, %s45
      %p49 = scmp.eq.s32.totalorder %s14, 0
      %p50 = por %p48, %p49
      %p51 = scmp.ne.s32.totalorder %s43, %s45
      %p52 = scmp.eq.s32.totalorder %s19, 1
      %p53 = por %p51, %p52
      %p54 = scmp.ne.s32.totalorder %s45, %s46
      %p55 = scmp.eq.s32.totalorder %s19, 0
      %p56 = por %p54, %p55
      %p57 = scmp.ne.s32.totalorder %s45, %s46
      %p58 = scmp.eq.s32.totalorder %s20, 1
      %p59 = por %p57, %p58
      %p61 = scmp.ne.s32.totalorder %s46, %s60
      %p62 = scmp.eq.s32.totalorder %s20, 0
      %p63 = por %p61, %p62
      %s64 = ssub.s32 %s14, %s21
      %p65 = scmp.eq.s32.totalorder %s64, 0
      %s67 = sadd.s32 %s66, 1
      %s68 = scalar_select %p65, %s66, %s67
      %p71 = pneg %p65
      %p72 = scmp.eq.s32.totalorder %s14, 1
      %p73 = por %p71, %p72
      %p74 = scmp.ne.s32.totalorder %s66, %s69
      %p75 = scmp.eq.s32.totalorder %s14, 0
      %p76 = por %p74, %p75
      %p77 = scmp.ne.s32.totalorder %s66, %s69
      %p78 = scmp.eq.s32.totalorder %s19, 1
      %p79 = por %p77, %p78
      %p80 = scmp.ne.s32.totalorder %s69, %s70
      %p81 = scmp.eq.s32.totalorder %s19, 0
      %p82 = por %p80, %p81
      %p83 = scmp.ne.s32.totalorder %s69, %s70
      %p84 = scmp.eq.s32.totalorder %s20, 1
      %p85 = por %p83, %p84
      %p87 = scmp.ne.s32.totalorder %s70, %s86
      %p88 = scmp.eq.s32.totalorder %s20, 0
      %p89 = por %p87, %p88
      %s90 = ssub.s32 %s14, %s21
      %p91 = scmp.eq.s32.totalorder %s90, 0
      %s93 = sadd.s32 %s92, 1
      %s94 = scalar_select %p91, %s92, %s93
      %p97 = pneg %p91
      %p98 = scmp.eq.s32.totalorder %s14, 1
      %p99 = por %p97, %p98
      %p100 = scmp.ne.s32.totalorder %s92, %s95
      %p101 = scmp.eq.s32.totalorder %s14, 0
      %p102 = por %p100, %p101
      %p103 = scmp.ne.s32.totalorder %s92, %s95
      %p104 = scmp.eq.s32.totalorder %s19, 1
      %p105 = por %p103, %p104
      %p106 = scmp.ne.s32.totalorder %s95, %s96
      %p107 = scmp.eq.s32.totalorder %s19, 0
      %p108 = por %p106, %p107
      %p109 = scmp.ne.s32.totalorder %s95, %s96
      %p110 = scmp.eq.s32.totalorder %s20, 1
      %p111 = por %p109, %p110
      %p113 = scmp.ne.s32.totalorder %s96, %s112
      %p114 = scmp.eq.s32.totalorder %s20, 0
      %p115 = por %p113, %p114
      %s116 = ssub.s32 %s14, %s21
      %p117 = scmp.eq.s32.totalorder %s116, 0
      %s119 = sadd.s32 %s118, 1
      %s120 = scalar_select %p117, %s118, %s119
      %p123 = pneg %p117
      %p124 = scmp.eq.s32.totalorder %s14, 1
      %p125 = por %p123, %p124
      %p126 = scmp.ne.s32.totalorder %s118, %s121
      %p127 = scmp.eq.s32.totalorder %s14, 0
      %p128 = por %p126, %p127
      %p129 = scmp.ne.s32.totalorder %s118, %s121
      %p130 = scmp.eq.s32.totalorder %s19, 1
      %p131 = por %p129, %p130
      %p132 = scmp.ne.s32.totalorder %s121, %s122
      %p133 = scmp.eq.s32.totalorder %s19, 0
      %p134 = por %p132, %p133
      %p135 = scmp.ne.s32.totalorder %s121, %s122
      %p136 = scmp.eq.s32.totalorder %s20, 1
      %p137 = por %p135, %p136
      %p139 = scmp.ne.s32.totalorder %s122, %s138
      %p140 = scmp.eq.s32.totalorder %s20, 0
      %p141 = por %p139, %p140
      %p142 = scmp.le.s32.totalorder 1, %s14
      %p143 = scmp.lt.s32.totalorder %s14, 3
      %p144 = pnand %p142, %p143
      %p145 = pneg %p144
      // Predicated region
      $region9: #{upsample_forward.1} parent=5 // pred_check
        _
      $region10: #{upsample_forward.1} parent=5 // pred_check_branch
        %147 = sbr.rel (%p144) target = $region12
      $region11: #{upsample_forward.1} parent=5 // pred_region
        %s148 = ssub.s32 %s14, 1
        // Predicated region
        $region13: #{upsample_forward.1} parent=11 // pred_check
          %p149 = pneg %p35
        $region14: #{upsample_forward.1} parent=11 // pred_check_branch
          %151 = sbr.rel (%p149) target = $region16
        $region15: #{upsample_forward.1} parent=11 // pred_region
          _
        $region16: #{upsample_forward.1} parent=11 // pred_fallthru
          _
        // Predicated region
        $region17: #{upsample_forward.1} parent=11 // pred_check
          %p152 = pneg %p56
        $region18: #{upsample_forward.1} parent=11 // pred_check_branch
          %154 = sbr.rel (%p152) target = $region20
        $region19: #{upsample_forward.1} parent=11 // pred_region
          %156 = vsyncadd [#allocation4], 0
          %s157 = sshll.u32 %s1, 4
          %s158 = int_to_ptr.hbm [resolvable:$true] %s157
          %s159 = sshll.u32 [#allocation3], 4
          %s160 = int_to_ptr.vmem [resolvable:$true] %s159
          %165 = dma.hbm_to_vmem [thread:$0]  %s158, 1024, %s160, [#allocation4], 128, 128, 8
        $region20: #{upsample_forward.1} parent=11 // pred_fallthru
          _
      $region12: #{upsample_forward.1} parent=5 // pred_fallthru
        _
      %p166 = scmp.lt.s32.totalorder %s14, 2
      // Predicated region
      $region21: #{upsample_forward.1} parent=5 // pred_check
        %p167 = pneg %p166
      $region22: #{upsample_forward.1} parent=5 // pred_check_branch
        %169 = sbr.rel (%p167) target = $region24
      $region23: #{upsample_forward.1} parent=5 // pred_region
        // Predicated region
        $region25: #{upsample_forward.1} parent=23 // pred_check
          %p170 = pneg %p76
        $region26: #{upsample_forward.1} parent=23 // pred_check_branch
          %172 = sbr.rel (%p170) target = $region28
        $region27: #{upsample_forward.1} parent=23 // pred_region
          %s173 = sand.u32 %s14, 1
          %s174 = scalar_lea.sflag [#allocation6], %s173
          %s175 = sand.u32 %s66, 1
          %s176 = smul.addr %s175, 1536
          %s177 = scalar_lea.vmem [#allocation5], %s176
          %s178 = smul.u32 2, %s14
          %180 = vsyncadd %s174, 0
          %s181 = smul.addr %s178, 4
          %s182 = scalar_lea.hbm %s2, %s181
          %s183 = sshll.u32 %s182, 4
          %s184 = int_to_ptr.hbm [resolvable:$true] %s183
          %s185 = sshll.u32 %s177, 4
          %s186 = int_to_ptr.vmem [resolvable:$true] %s185
          %191 = dma.hbm_to_vmem [thread:$0]  %s184, 24576, %s186, %s174, 256, 128, 8
        $region28: #{upsample_forward.1} parent=23 // pred_fallthru
          _
        // Predicated region
        $region29: #{upsample_forward.1} parent=23 // pred_check
          %p192 = pneg %p102
        $region30: #{upsample_forward.1} parent=23 // pred_check_branch
          %194 = sbr.rel (%p192) target = $region32
        $region31: #{upsample_forward.1} parent=23 // pred_region
          %s195 = sand.u32 %s14, 1
          %s196 = scalar_lea.sflag [#allocation6], %s195
          %s197 = sand.u32 %s92, 1
          %s198 = smul.addr %s197, 2
          %s199 = scalar_lea.vmem [#allocation7], %s198
          %s200 = smul.u32 2, %s14
          %202 = vsyncadd %s196, 0
          %s203 = scalar_lea.hbm %s3, %s200
          %s205 = sshll.u32 %s203, 4
          %s206 = int_to_ptr.hbm [resolvable:$true] %s205
          %s207 = sshll.u32 %s199, 4
          %s208 = int_to_ptr.vmem [resolvable:$true] %s207
          %210 = dma.hbm_to_vmem [thread:$0]  %s206, 32, %s208, %s196
        $region32: #{upsample_forward.1} parent=23 // pred_fallthru
          _
      $region24: #{upsample_forward.1} parent=5 // pred_fallthru
        _
      %p211 = scmp.le.s32.totalorder 1, %s14
      %p212 = scmp.lt.s32.totalorder %s14, 3
      %p213 = pnand %p211, %p212
      %p214 = pneg %p213
      // Predicated region
      $region33: #{upsample_forward.1} parent=5 // pred_check
        _
      $region34: #{upsample_forward.1} parent=5 // pred_check_branch
        %216 = sbr.rel (%p213) target = $region36
      $region35: #{upsample_forward.1} parent=5 // pred_region
        %s217 = ssub.s32 %s14, 1
        // Predicated region
        $region37: #{upsample_forward.1} parent=35 // pred_check
          %p218 = pneg %p56
        $region38: #{upsample_forward.1} parent=35 // pred_check_branch
          %220 = sbr.rel (%p218) target = $region40
        $region39: #{upsample_forward.1} parent=35 // pred_region
          %222 = dma.done [#allocation4], 1024
        $region40: #{upsample_forward.1} parent=35 // pred_fallthru
          _
        %s223 = sand.u32 %s19, 1
        %s224 = scalar_lea.sflag [#allocation6], %s223
        %s225 = sand.u32 %s69, 1
        %s226 = smul.addr %s225, 1536
        %s227 = scalar_lea.vmem [#allocation5], %s226
        // Predicated region
        $region41: #{upsample_forward.1} parent=35 // pred_check
          %p228 = pneg %p82
        $region42: #{upsample_forward.1} parent=35 // pred_check_branch
          %230 = sbr.rel (%p228) target = $region44
        $region43: #{upsample_forward.1} parent=35 // pred_region
          %232 = dma.done %s224, 24576
        $region44: #{upsample_forward.1} parent=35 // pred_fallthru
          _
        %s233 = sand.u32 %s19, 1
        %s234 = scalar_lea.sflag [#allocation6], %s233
        %s235 = sand.u32 %s95, 1
        %s236 = smul.addr %s235, 2
        %s237 = scalar_lea.vmem [#allocation7], %s236
        // Predicated region
        $region45: #{upsample_forward.1} parent=35 // pred_check
          %p238 = pneg %p108
        $region46: #{upsample_forward.1} parent=35 // pred_check_branch
          %240 = sbr.rel (%p238) target = $region48
        $region47: #{upsample_forward.1} parent=35 // pred_region
          %242 = dma.done %s234, 32
        $region48: #{upsample_forward.1} parent=35 // pred_fallthru
          _
        %p243 = pneg %p35
        %p244 = pneg %p32
        %p245 = pneg %p56
        %p246 = pneg %p53
        %s247 = sand.u32 %s19, 1
        %s248 = scalar_lea.sflag [#allocation6], %s247
        %s249 = sand.u32 %s69, 1
        %s250 = smul.addr %s249, 1536
        %s251 = scalar_lea.vmem [#allocation5], %s250
        %p252 = pneg %p82
        %p253 = pneg %p79
        %s254 = sand.u32 %s19, 1
        %s255 = scalar_lea.sflag [#allocation6], %s254
        %s256 = sand.u32 %s95, 1
        %s257 = smul.addr %s256, 2
        %s258 = scalar_lea.vmem [#allocation7], %s257
        %p259 = pneg %p108
        %p260 = pneg %p105
        %p261 = pneg %p134
        %p262 = pneg %p131
        %s263 = sand.u32 %s121, 1
        %s264 = sand.u32 %s121, 1
        %s265 = smul.addr %s264, 128
        %s266 = scalar_lea.vmem [#allocation8], %s265
        %s267 = smul.u32 2, %s19
        %s268 = smul.u32 2, %s19
        %s269 = smul.u32 2, %s19
        %v270 = vld [vmem:[%s0] sm:$0xff]
        %v271 = vld [vmem:[%s0 + $0x8] sm:$0xff]
        %v272 = vld [vmem:[%s0 + $0x10] sm:$0xff]
        %v273 = vld [vmem:[%s0 + $0x18] sm:$0xff]
        %v274 = vld [vmem:[%s0 + $0x20] sm:$0xff]
        %v275 = vld [vmem:[%s0 + $0x28] sm:$0xff]
        %v276 = vld [vmem:[%s0 + $0x30] sm:$0xff]
        %v277 = vld [vmem:[%s0 + $0x38] sm:$0xff]
        %v278 = vld [vmem:[%s227] sm:$0xff]
        %v279 = vld [vmem:[%s227 + $0x8] sm:$0xff]
        %v280 = vld [vmem:[%s227 + $0x10] sm:$0xff]
        %v281 = vld [vmem:[%s227 + $0x18] sm:$0xff]
        %v282 = vld [vmem:[%s227 + $0x20] sm:$0xff]
        %v283 = vld [vmem:[%s227 + $0x28] sm:$0xff]
        %v284 = vld [vmem:[%s227 + $0x30] sm:$0xff]
        %v285 = vld [vmem:[%s227 + $0x38] sm:$0xff]
        %v286 = vld [vmem:[%s227 + $0x40] sm:$0xff]
        %v287 = vld [vmem:[%s227 + $0x48] sm:$0xff]
        %v288 = vld [vmem:[%s227 + $0x50] sm:$0xff]
        %v289 = vld [vmem:[%s227 + $0x58] sm:$0xff]
        %v290 = vld [vmem:[%s227 + $0x60] sm:$0xff]
        %v291 = vld [vmem:[%s227 + $0x68] sm:$0xff]
        %v292 = vld [vmem:[%s227 + $0x70] sm:$0xff]
        %v293 = vld [vmem:[%s227 + $0x78] sm:$0xff]
        %v294 = vld [vmem:[%s227 + $0x80] sm:$0xff]
        %v295 = vld [vmem:[%s227 + $0x88] sm:$0xff]
        %v296 = vld [vmem:[%s227 + $0x90] sm:$0xff]
        %v297 = vld [vmem:[%s227 + $0x98] sm:$0xff]
        %v298 = vld [vmem:[%s227 + $0xa0] sm:$0xff]
        %v299 = vld [vmem:[%s227 + $0xa8] sm:$0xff]
        %v300 = vld [vmem:[%s227 + $0xb0] sm:$0xff]
        %v301 = vld [vmem:[%s227 + $0xb8] sm:$0xff]
        %v302 = vld [vmem:[%s227 + $0xc0] sm:$0xff]
        %v303 = vld [vmem:[%s227 + $0xc8] sm:$0xff]
        %v304 = vld [vmem:[%s227 + $0xd0] sm:$0xff]
        %v305 = vld [vmem:[%s227 + $0xd8] sm:$0xff]
        %v306 = vld [vmem:[%s227 + $0xe0] sm:$0xff]
        %v307 = vld [vmem:[%s227 + $0xe8] sm:$0xff]
        %v308 = vld [vmem:[%s227 + $0xf0] sm:$0xff]
        %v309 = vld [vmem:[%s227 + $0xf8] sm:$0xff]
        %v310 = vld [vmem:[%s227 + $0x100] sm:$0xff]
        %v311 = vld [vmem:[%s227 + $0x108] sm:$0xff]
        %v312 = vld [vmem:[%s227 + $0x110] sm:$0xff]
        %v313 = vld [vmem:[%s227 + $0x118] sm:$0xff]
        %v314 = vld [vmem:[%s227 + $0x120] sm:$0xff]
        %v315 = vld [vmem:[%s227 + $0x128] sm:$0xff]
        %v316 = vld [vmem:[%s227 + $0x130] sm:$0xff]
        %v317 = vld [vmem:[%s227 + $0x138] sm:$0xff]
        %v318 = vld [vmem:[%s227 + $0x140] sm:$0xff]
        %v319 = vld [vmem:[%s227 + $0x148] sm:$0xff]
        %v320 = vld [vmem:[%s227 + $0x150] sm:$0xff]
        %v321 = vld [vmem:[%s227 + $0x158] sm:$0xff]
        %v322 = vld [vmem:[%s227 + $0x160] sm:$0xff]
        %v323 = vld [vmem:[%s227 + $0x168] sm:$0xff]
        %v324 = vld [vmem:[%s227 + $0x170] sm:$0xff]
        %v325 = vld [vmem:[%s227 + $0x178] sm:$0xff]
        %v326 = vld [vmem:[%s227 + $0x180] sm:$0xff]
        %v327 = vld [vmem:[%s227 + $0x188] sm:$0xff]
        %v328 = vld [vmem:[%s227 + $0x190] sm:$0xff]
        %v329 = vld [vmem:[%s227 + $0x198] sm:$0xff]
        %v330 = vld [vmem:[%s227 + $0x1a0] sm:$0xff]
        %v331 = vld [vmem:[%s227 + $0x1a8] sm:$0xff]
        %v332 = vld [vmem:[%s227 + $0x1b0] sm:$0xff]
        %v333 = vld [vmem:[%s227 + $0x1b8] sm:$0xff]
        %v334 = vld [vmem:[%s227 + $0x1c0] sm:$0xff]
        %v335 = vld [vmem:[%s227 + $0x1c8] sm:$0xff]
        %v336 = vld [vmem:[%s227 + $0x1d0] sm:$0xff]
        %v337 = vld [vmem:[%s227 + $0x1d8] sm:$0xff]
        %v338 = vld [vmem:[%s227 + $0x1e0] sm:$0xff]
        %v339 = vld [vmem:[%s227 + $0x1e8] sm:$0xff]
        %v340 = vld [vmem:[%s227 + $0x1f0] sm:$0xff]
        %v341 = vld [vmem:[%s227 + $0x1f8] sm:$0xff]
        %v350 = vunpack.c.l.b16 %v270
        %v351 = vunpack.c.h.b16 %v270
        %v352 = vunpack.c.l.b16 %v271
        %v353 = vunpack.c.h.b16 %v271
        %v354 = vunpack.c.l.b16 %v272
        %v355 = vunpack.c.h.b16 %v272
        %v356 = vunpack.c.l.b16 %v273
        %v357 = vunpack.c.h.b16 %v273
        %v358 = vunpack.c.l.b16 %v274
        %v359 = vunpack.c.h.b16 %v274
        %v360 = vunpack.c.l.b16 %v275
        %v361 = vunpack.c.h.b16 %v275
        %v362 = vunpack.c.l.b16 %v276
        %v363 = vunpack.c.h.b16 %v276
        %v364 = vunpack.c.l.b16 %v277
        %v365 = vunpack.c.h.b16 %v277
        %v366 = vpack.c.b16 %v354, %v350
        %v367 = vpack.c.b16 %v355, %v351
        %v368 = vpack.c.b16 %v356, %v352
        %v369 = vpack.c.b16 %v357, %v353
        %v370 = vpack.c.b16 %v362, %v358
        %v371 = vpack.c.b16 %v363, %v359
        %v372 = vpack.c.b16 %v364, %v360
        %v373 = vpack.c.b16 %v365, %v361
        %v446 = vunpack.c.l.b16 %v278
        %v447 = vunpack.c.h.b16 %v278
        %v448 = vunpack.c.l.b16 %v279
        %v449 = vunpack.c.h.b16 %v279
        %v450 = vunpack.c.l.b16 %v280
        %v451 = vunpack.c.h.b16 %v280
        %v452 = vunpack.c.l.b16 %v281
        %v453 = vunpack.c.h.b16 %v281
        %v454 = vunpack.c.l.b16 %v282
        %v455 = vunpack.c.h.b16 %v282
        %v456 = vunpack.c.l.b16 %v283
        %v457 = vunpack.c.h.b16 %v283
        %v458 = vunpack.c.l.b16 %v284
        %v459 = vunpack.c.h.b16 %v284
        %v460 = vunpack.c.l.b16 %v285
        %v461 = vunpack.c.h.b16 %v285
        %v462 = vunpack.c.l.b16 %v286
        %v463 = vunpack.c.h.b16 %v286
        %v464 = vunpack.c.l.b16 %v287
        %v465 = vunpack.c.h.b16 %v287
        %v466 = vunpack.c.l.b16 %v288
        %v467 = vunpack.c.h.b16 %v288
        %v468 = vunpack.c.l.b16 %v289
        %v469 = vunpack.c.h.b16 %v289
        %v470 = vunpack.c.l.b16 %v290
        %v471 = vunpack.c.h.b16 %v290
        %v472 = vunpack.c.l.b16 %v291
        %v473 = vunpack.c.h.b16 %v291
        %v474 = vunpack.c.l.b16 %v292
        %v475 = vunpack.c.h.b16 %v292
        %v476 = vunpack.c.l.b16 %v293
        %v477 = vunpack.c.h.b16 %v293
        %v478 = vunpack.c.l.b16 %v294
        %v479 = vunpack.c.h.b16 %v294
        %v480 = vunpack.c.l.b16 %v295
        %v481 = vunpack.c.h.b16 %v295
        %v482 = vunpack.c.l.b16 %v296
        %v483 = vunpack.c.h.b16 %v296
        %v484 = vunpack.c.l.b16 %v297
        %v485 = vunpack.c.h.b16 %v297
        %v486 = vunpack.c.l.b16 %v298
        %v487 = vunpack.c.h.b16 %v298
        %v488 = vunpack.c.l.b16 %v299
        %v489 = vunpack.c.h.b16 %v299
        %v490 = vunpack.c.l.b16 %v300
        %v491 = vunpack.c.h.b16 %v300
        %v492 = vunpack.c.l.b16 %v301
        %v493 = vunpack.c.h.b16 %v301
        %v494 = vunpack.c.l.b16 %v302
        %v495 = vunpack.c.h.b16 %v302
        %v496 = vunpack.c.l.b16 %v303
        %v497 = vunpack.c.h.b16 %v303
        %v498 = vunpack.c.l.b16 %v304
        %v499 = vunpack.c.h.b16 %v304
        %v500 = vunpack.c.l.b16 %v305
        %v501 = vunpack.c.h.b16 %v305
        %v502 = vunpack.c.l.b16 %v306
        %v503 = vunpack.c.h.b16 %v306
        %v504 = vunpack.c.l.b16 %v307
        %v505 = vunpack.c.h.b16 %v307
        %v506 = vunpack.c.l.b16 %v308
        %v507 = vunpack.c.h.b16 %v308
        %v508 = vunpack.c.l.b16 %v309
        %v509 = vunpack.c.h.b16 %v309
        %v510 = vunpack.c.l.b16 %v310
        %v511 = vunpack.c.h.b16 %v310
        %v512 = vunpack.c.l.b16 %v311
        %v513 = vunpack.c.h.b16 %v311
        %v514 = vunpack.c.l.b16 %v312
        %v515 = vunpack.c.h.b16 %v312
        %v516 = vunpack.c.l.b16 %v313
        %v517 = vunpack.c.h.b16 %v313
        %v518 = vunpack.c.l.b16 %v314
        %v519 = vunpack.c.h.b16 %v314
        %v520 = vunpack.c.l.b16 %v315
        %v521 = vunpack.c.h.b16 %v315
        %v522 = vunpack.c.l.b16 %v316
        %v523 = vunpack.c.h.b16 %v316
        %v524 = vunpack.c.l.b16 %v317
        %v525 = vunpack.c.h.b16 %v317
        %v526 = vunpack.c.l.b16 %v318
        %v527 = vunpack.c.h.b16 %v318
        %v528 = vunpack.c.l.b16 %v319
        %v529 = vunpack.c.h.b16 %v319
        %v530 = vunpack.c.l.b16 %v320
        %v531 = vunpack.c.h.b16 %v320
        %v532 = vunpack.c.l.b16 %v321
        %v533 = vunpack.c.h.b16 %v321
        %v534 = vunpack.c.l.b16 %v322
        %v535 = vunpack.c.h.b16 %v322
        %v536 = vunpack.c.l.b16 %v323
        %v537 = vunpack.c.h.b16 %v323
        %v538 = vunpack.c.l.b16 %v324
        %v539 = vunpack.c.h.b16 %v324
        %v540 = vunpack.c.l.b16 %v325
        %v541 = vunpack.c.h.b16 %v325
        %v542 = vunpack.c.l.b16 %v326
        %v543 = vunpack.c.h.b16 %v326
        %v544 = vunpack.c.l.b16 %v327
        %v545 = vunpack.c.h.b16 %v327
        %v546 = vunpack.c.l.b16 %v328
        %v547 = vunpack.c.h.b16 %v328
        %v548 = vunpack.c.l.b16 %v329
        %v549 = vunpack.c.h.b16 %v329
        %v550 = vunpack.c.l.b16 %v330
        %v551 = vunpack.c.h.b16 %v330
        %v552 = vunpack.c.l.b16 %v331
        %v553 = vunpack.c.h.b16 %v331
        %v554 = vunpack.c.l.b16 %v332
        %v555 = vunpack.c.h.b16 %v332
        %v556 = vunpack.c.l.b16 %v333
        %v557 = vunpack.c.h.b16 %v333
        %v558 = vunpack.c.l.b16 %v334
        %v559 = vunpack.c.h.b16 %v334
        %v560 = vunpack.c.l.b16 %v335
        %v561 = vunpack.c.h.b16 %v335
        %v562 = vunpack.c.l.b16 %v336
        %v563 = vunpack.c.h.b16 %v336
        %v564 = vunpack.c.l.b16 %v337
        %v565 = vunpack.c.h.b16 %v337
        %v566 = vunpack.c.l.b16 %v338
        %v567 = vunpack.c.h.b16 %v338
        %v568 = vunpack.c.l.b16 %v339
        %v569 = vunpack.c.h.b16 %v339
        %v570 = vunpack.c.l.b16 %v340
        %v571 = vunpack.c.h.b16 %v340
        %v572 = vunpack.c.l.b16 %v341
        %v573 = vunpack.c.h.b16 %v341
        %v574 = vpack.c.b16 %v448, %v446
        %v575 = vpack.c.b16 %v449, %v447
        %v576 = vpack.c.b16 %v452, %v450
        %v577 = vpack.c.b16 %v453, %v451
        %v578 = vpack.c.b16 %v456, %v454
        %v579 = vpack.c.b16 %v457, %v455
        %v580 = vpack.c.b16 %v460, %v458
        %v581 = vpack.c.b16 %v461, %v459
        %v582 = vpack.c.b16 %v464, %v462
        %v583 = vpack.c.b16 %v465, %v463
        %v584 = vpack.c.b16 %v468, %v466
        %v585 = vpack.c.b16 %v469, %v467
        %v586 = vpack.c.b16 %v472, %v470
        %v587 = vpack.c.b16 %v473, %v471
        %v588 = vpack.c.b16 %v476, %v474
        %v589 = vpack.c.b16 %v477, %v475
        %v590 = vpack.c.b16 %v480, %v478
        %v591 = vpack.c.b16 %v481, %v479
        %v592 = vpack.c.b16 %v484, %v482
        %v593 = vpack.c.b16 %v485, %v483
        %v594 = vpack.c.b16 %v488, %v486
        %v595 = vpack.c.b16 %v489, %v487
        %v596 = vpack.c.b16 %v492, %v490
        %v597 = vpack.c.b16 %v493, %v491
        %v598 = vpack.c.b16 %v496, %v494
        %v599 = vpack.c.b16 %v497, %v495
        %v600 = vpack.c.b16 %v500, %v498
        %v601 = vpack.c.b16 %v501, %v499
        %v602 = vpack.c.b16 %v504, %v502
        %v603 = vpack.c.b16 %v505, %v503
        %v604 = vpack.c.b16 %v508, %v506
        %v605 = vpack.c.b16 %v509, %v507
        %v606 = vpack.c.b16 %v512, %v510
        %v607 = vpack.c.b16 %v513, %v511
        %v608 = vpack.c.b16 %v516, %v514
        %v609 = vpack.c.b16 %v517, %v515
        %v610 = vpack.c.b16 %v520, %v518
        %v611 = vpack.c.b16 %v521, %v519
        %v612 = vpack.c.b16 %v524, %v522
        %v613 = vpack.c.b16 %v525, %v523
        %v614 = vpack.c.b16 %v528, %v526
        %v615 = vpack.c.b16 %v529, %v527
        %v616 = vpack.c.b16 %v532, %v530
        %v617 = vpack.c.b16 %v533, %v531
        %v618 = vpack.c.b16 %v536, %v534
        %v619 = vpack.c.b16 %v537, %v535
        %v620 = vpack.c.b16 %v540, %v538
        %v621 = vpack.c.b16 %v541, %v539
        %v622 = vpack.c.b16 %v544, %v542
        %v623 = vpack.c.b16 %v545, %v543
        %v624 = vpack.c.b16 %v548, %v546
        %v625 = vpack.c.b16 %v549, %v547
        %v626 = vpack.c.b16 %v552, %v550
        %v627 = vpack.c.b16 %v553, %v551
        %v628 = vpack.c.b16 %v556, %v554
        %v629 = vpack.c.b16 %v557, %v555
        %v630 = vpack.c.b16 %v560, %v558
        %v631 = vpack.c.b16 %v561, %v559
        %v632 = vpack.c.b16 %v564, %v562
        %v633 = vpack.c.b16 %v565, %v563
        %v634 = vpack.c.b16 %v568, %v566
        %v635 = vpack.c.b16 %v569, %v567
        %v636 = vpack.c.b16 %v572, %v570
        %v637 = vpack.c.b16 %v573, %v571
        %702 = vmatpush.bf16.msra.mxu0 %v588
        %703 = vmatpush.bf16.msra.mxu0 %v586
        %704 = vmatpush.bf16.msra.mxu0 %v584
        %705 = vmatpush.bf16.msra.mxu0 %v582
        %706 = vmatpush.bf16.msra.mxu0 %v580
        %707 = vmatpush.bf16.msra.mxu0 %v578
        %708 = vmatpush.bf16.msra.mxu0 %v576
        %709 = vmatpush.bf16.msra.mxu0 %v574
        %710 = vmatmul.bf16.gmra.mxu0 %v366
        %v711 = vpop.f32.mrf.mxu0
        %v712 = vadd.f32 0.0, %v711
        %v713 = vpop.f32.mrf.mxu0
        %v714 = vadd.f32 0.0, %v713
        %715 = vmatmul.bf16.gmra.mxu0 %v370
        %v716 = vpop.f32.mrf.mxu0
        %v717 = vadd.f32 0.0, %v716
        %v718 = vpop.f32.mrf.mxu0
        %v719 = vadd.f32 0.0, %v718
        %720 = vdwg.mxu0
        %721 = vmatpush.bf16.msra.mxu0 %v604
        %722 = vmatpush.bf16.msra.mxu0 %v602
        %723 = vmatpush.bf16.msra.mxu0 %v600
        %724 = vmatpush.bf16.msra.mxu0 %v598
        %725 = vmatpush.bf16.msra.mxu0 %v596
        %726 = vmatpush.bf16.msra.mxu0 %v594
        %727 = vmatpush.bf16.msra.mxu0 %v592
        %728 = vmatpush.bf16.msra.mxu0 %v590
        %729 = vmatmul.bf16.gmra.mxu0 %v367
        %v730 = vpop.f32.mrf.mxu0
        %v731 = vadd.f32 %v712, %v730
        %v732 = vpop.f32.mrf.mxu0
        %v733 = vadd.f32 %v714, %v732
        %734 = vmatmul.bf16.gmra.mxu0 %v371
        %v735 = vpop.f32.mrf.mxu0
        %v736 = vadd.f32 %v717, %v735
        %v737 = vpop.f32.mrf.mxu0
        %v738 = vadd.f32 %v719, %v737
        %739 = vdwg.mxu0
        %740 = vmatpush.bf16.msra.mxu0 %v620
        %741 = vmatpush.bf16.msra.mxu0 %v618
        %742 = vmatpush.bf16.msra.mxu0 %v616
        %743 = vmatpush.bf16.msra.mxu0 %v614
        %744 = vmatpush.bf16.msra.mxu0 %v612
        %745 = vmatpush.bf16.msra.mxu0 %v610
        %746 = vmatpush.bf16.msra.mxu0 %v608
        %747 = vmatpush.bf16.msra.mxu0 %v606
        %748 = vmatmul.bf16.gmra.mxu0 %v368
        %v749 = vpop.f32.mrf.mxu0
        %v750 = vadd.f32 %v731, %v749
        %v751 = vpop.f32.mrf.mxu0
        %v752 = vadd.f32 %v733, %v751
        %753 = vmatmul.bf16.gmra.mxu0 %v372
        %v754 = vpop.f32.mrf.mxu0
        %v755 = vadd.f32 %v736, %v754
        %v756 = vpop.f32.mrf.mxu0
        %v757 = vadd.f32 %v738, %v756
        %758 = vdwg.mxu0
        %759 = vmatpush.bf16.msra.mxu0 %v636
        %760 = vmatpush.bf16.msra.mxu0 %v634
        %761 = vmatpush.bf16.msra.mxu0 %v632
        %762 = vmatpush.bf16.msra.mxu0 %v630
        %763 = vmatpush.bf16.msra.mxu0 %v628
        %764 = vmatpush.bf16.msra.mxu0 %v626
        %765 = vmatpush.bf16.msra.mxu0 %v624
        %766 = vmatpush.bf16.msra.mxu0 %v622
        %767 = vmatmul.bf16.gmra.mxu0 %v369
        %v768 = vpop.f32.mrf.mxu0
        %v769 = vadd.f32 %v750, %v768
        %v770 = vpop.f32.mrf.mxu0
        %v771 = vadd.f32 %v752, %v770
        %772 = vmatmul.bf16.gmra.mxu0 %v373
        %v773 = vpop.f32.mrf.mxu0
        %v774 = vadd.f32 %v755, %v773
        %v775 = vpop.f32.mrf.mxu0
        %v776 = vadd.f32 %v757, %v775
        %777 = vdwg.mxu0
        %778 = vmatpush.bf16.msra.mxu0 %v589
        %779 = vmatpush.bf16.msra.mxu0 %v587
        %780 = vmatpush.bf16.msra.mxu0 %v585
        %781 = vmatpush.bf16.msra.mxu0 %v583
        %782 = vmatpush.bf16.msra.mxu0 %v581
        %783 = vmatpush.bf16.msra.mxu0 %v579
        %784 = vmatpush.bf16.msra.mxu0 %v577
        %785 = vmatpush.bf16.msra.mxu0 %v575
        %786 = vmatmul.bf16.gmra.mxu0 %v366
        %v787 = vpop.f32.mrf.mxu0
        %v788 = vadd.f32 0.0, %v787
        %v789 = vpop.f32.mrf.mxu0
        %v790 = vadd.f32 0.0, %v789
        %791 = vmatmul.bf16.gmra.mxu0 %v370
        %v792 = vpop.f32.mrf.mxu0
        %v793 = vadd.f32 0.0, %v792
        %v794 = vpop.f32.mrf.mxu0
        %v795 = vadd.f32 0.0, %v794
        %796 = vdwg.mxu0
        %797 = vmatpush.bf16.msra.mxu0 %v605
        %798 = vmatpush.bf16.msra.mxu0 %v603
        %799 = vmatpush.bf16.msra.mxu0 %v601
        %800 = vmatpush.bf16.msra.mxu0 %v599
        %801 = vmatpush.bf16.msra.mxu0 %v597
        %802 = vmatpush.bf16.msra.mxu0 %v595
        %803 = vmatpush.bf16.msra.mxu0 %v593
        %804 = vmatpush.bf16.msra.mxu0 %v591
        %805 = vmatmul.bf16.gmra.mxu0 %v367
        %v806 = vpop.f32.mrf.mxu0
        %v807 = vadd.f32 %v788, %v806
        %v808 = vpop.f32.mrf.mxu0
        %v809 = vadd.f32 %v790, %v808
        %810 = vmatmul.bf16.gmra.mxu0 %v371
        %v811 = vpop.f32.mrf.mxu0
        %v812 = vadd.f32 %v793, %v811
        %v813 = vpop.f32.mrf.mxu0
        %v814 = vadd.f32 %v795, %v813
        %815 = vdwg.mxu0
        %816 = vmatpush.bf16.msra.mxu0 %v621
        %817 = vmatpush.bf16.msra.mxu0 %v619
        %818 = vmatpush.bf16.msra.mxu0 %v617
        %819 = vmatpush.bf16.msra.mxu0 %v615
        %820 = vmatpush.bf16.msra.mxu0 %v613
        %821 = vmatpush.bf16.msra.mxu0 %v611
        %822 = vmatpush.bf16.msra.mxu0 %v609
        %823 = vmatpush.bf16.msra.mxu0 %v607
        %824 = vmatmul.bf16.gmra.mxu0 %v368
        %v825 = vpop.f32.mrf.mxu0
        %v826 = vadd.f32 %v807, %v825
        %v827 = vpop.f32.mrf.mxu0
        %v828 = vadd.f32 %v809, %v827
        %829 = vmatmul.bf16.gmra.mxu0 %v372
        %v830 = vpop.f32.mrf.mxu0
        %v831 = vadd.f32 %v812, %v830
        %v832 = vpop.f32.mrf.mxu0
        %v833 = vadd.f32 %v814, %v832
        %834 = vdwg.mxu0
        %835 = vmatpush.bf16.msra.mxu0 %v637
        %836 = vmatpush.bf16.msra.mxu0 %v635
        %837 = vmatpush.bf16.msra.mxu0 %v633
        %838 = vmatpush.bf16.msra.mxu0 %v631
        %839 = vmatpush.bf16.msra.mxu0 %v629
        %840 = vmatpush.bf16.msra.mxu0 %v627
        %841 = vmatpush.bf16.msra.mxu0 %v625
        %842 = vmatpush.bf16.msra.mxu0 %v623
        %843 = vmatmul.bf16.gmra.mxu0 %v369
        %v844 = vpop.f32.mrf.mxu0
        %v845 = vadd.f32 %v826, %v844
        %v846 = vpop.f32.mrf.mxu0
        %v847 = vadd.f32 %v828, %v846
        %848 = vmatmul.bf16.gmra.mxu0 %v373
        %v849 = vpop.f32.mrf.mxu0
        %v850 = vadd.f32 %v831, %v849
        %v851 = vpop.f32.mrf.mxu0
        %v852 = vadd.f32 %v833, %v851
        %853 = vdwg.mxu0
        %854 = vst [vmem:[#allocation2] sm:$0xff] %v769
        %855 = vst [vmem:[#allocation2 + $0x8] sm:$0xff] %v845
        %856 = vst [vmem:[#allocation2 + $0x10] sm:$0xff] %v771
        %857 = vst [vmem:[#allocation2 + $0x18] sm:$0xff] %v847
        %858 = vst [vmem:[#allocation2 + $0x20] sm:$0xff] %v774
        %859 = vst [vmem:[#allocation2 + $0x28] sm:$0xff] %v850
        %860 = vst [vmem:[#allocation2 + $0x30] sm:$0xff] %v776
        %861 = vst [vmem:[#allocation2 + $0x38] sm:$0xff] %v852
        %s862 = scalar_lea.vmem %s227, 512 [#allocation5]
        %v863 = vld [vmem:[%s862] sm:$0xff]
        %v864 = vld [vmem:[%s862 + $0x8] sm:$0xff]
        %v865 = vld [vmem:[%s862 + $0x10] sm:$0xff]
        %v866 = vld [vmem:[%s862 + $0x18] sm:$0xff]
        %v867 = vld [vmem:[%s862 + $0x20] sm:$0xff]
        %v868 = vld [vmem:[%s862 + $0x28] sm:$0xff]
        %v869 = vld [vmem:[%s862 + $0x30] sm:$0xff]
        %v870 = vld [vmem:[%s862 + $0x38] sm:$0xff]
        %v871 = vld [vmem:[%s862 + $0x40] sm:$0xff]
        %v872 = vld [vmem:[%s862 + $0x48] sm:$0xff]
        %v873 = vld [vmem:[%s862 + $0x50] sm:$0xff]
        %v874 = vld [vmem:[%s862 + $0x58] sm:$0xff]
        %v875 = vld [vmem:[%s862 + $0x60] sm:$0xff]
        %v876 = vld [vmem:[%s862 + $0x68] sm:$0xff]
        %v877 = vld [vmem:[%s862 + $0x70] sm:$0xff]
        %v878 = vld [vmem:[%s862 + $0x78] sm:$0xff]
        %v879 = vld [vmem:[%s862 + $0x80] sm:$0xff]
        %v880 = vld [vmem:[%s862 + $0x88] sm:$0xff]
        %v881 = vld [vmem:[%s862 + $0x90] sm:$0xff]
        %v882 = vld [vmem:[%s862 + $0x98] sm:$0xff]
        %v883 = vld [vmem:[%s862 + $0xa0] sm:$0xff]
        %v884 = vld [vmem:[%s862 + $0xa8] sm:$0xff]
        %v885 = vld [vmem:[%s862 + $0xb0] sm:$0xff]
        %v886 = vld [vmem:[%s862 + $0xb8] sm:$0xff]
        %v887 = vld [vmem:[%s862 + $0xc0] sm:$0xff]
        %v888 = vld [vmem:[%s862 + $0xc8] sm:$0xff]
        %v889 = vld [vmem:[%s862 + $0xd0] sm:$0xff]
        %v890 = vld [vmem:[%s862 + $0xd8] sm:$0xff]
        %v891 = vld [vmem:[%s862 + $0xe0] sm:$0xff]
        %v892 = vld [vmem:[%s862 + $0xe8] sm:$0xff]
        %v893 = vld [vmem:[%s862 + $0xf0] sm:$0xff]
        %v894 = vld [vmem:[%s862 + $0xf8] sm:$0xff]
        %v895 = vld [vmem:[%s862 + $0x100] sm:$0xff]
        %v896 = vld [vmem:[%s862 + $0x108] sm:$0xff]
        %v897 = vld [vmem:[%s862 + $0x110] sm:$0xff]
        %v898 = vld [vmem:[%s862 + $0x118] sm:$0xff]
        %v899 = vld [vmem:[%s862 + $0x120] sm:$0xff]
        %v900 = vld [vmem:[%s862 + $0x128] sm:$0xff]
        %v901 = vld [vmem:[%s862 + $0x130] sm:$0xff]
        %v902 = vld [vmem:[%s862 + $0x138] sm:$0xff]
        %v903 = vld [vmem:[%s862 + $0x140] sm:$0xff]
        %v904 = vld [vmem:[%s862 + $0x148] sm:$0xff]
        %v905 = vld [vmem:[%s862 + $0x150] sm:$0xff]
        %v906 = vld [vmem:[%s862 + $0x158] sm:$0xff]
        %v907 = vld [vmem:[%s862 + $0x160] sm:$0xff]
        %v908 = vld [vmem:[%s862 + $0x168] sm:$0xff]
        %v909 = vld [vmem:[%s862 + $0x170] sm:$0xff]
        %v910 = vld [vmem:[%s862 + $0x178] sm:$0xff]
        %v911 = vld [vmem:[%s862 + $0x180] sm:$0xff]
        %v912 = vld [vmem:[%s862 + $0x188] sm:$0xff]
        %v913 = vld [vmem:[%s862 + $0x190] sm:$0xff]
        %v914 = vld [vmem:[%s862 + $0x198] sm:$0xff]
        %v915 = vld [vmem:[%s862 + $0x1a0] sm:$0xff]
        %v916 = vld [vmem:[%s862 + $0x1a8] sm:$0xff]
        %v917 = vld [vmem:[%s862 + $0x1b0] sm:$0xff]
        %v918 = vld [vmem:[%s862 + $0x1b8] sm:$0xff]
        %v919 = vld [vmem:[%s862 + $0x1c0] sm:$0xff]
        %v920 = vld [vmem:[%s862 + $0x1c8] sm:$0xff]
        %v921 = vld [vmem:[%s862 + $0x1d0] sm:$0xff]
        %v922 = vld [vmem:[%s862 + $0x1d8] sm:$0xff]
        %v923 = vld [vmem:[%s862 + $0x1e0] sm:$0xff]
        %v924 = vld [vmem:[%s862 + $0x1e8] sm:$0xff]
        %v925 = vld [vmem:[%s862 + $0x1f0] sm:$0xff]
        %v926 = vld [vmem:[%s862 + $0x1f8] sm:$0xff]
        %v991 = vunpack.c.l.b16 %v863
        %v992 = vunpack.c.h.b16 %v863
        %v993 = vunpack.c.l.b16 %v864
        %v994 = vunpack.c.h.b16 %v864
        %v995 = vunpack.c.l.b16 %v865
        %v996 = vunpack.c.h.b16 %v865
        %v997 = vunpack.c.l.b16 %v866
        %v998 = vunpack.c.h.b16 %v866
        %v999 = vunpack.c.l.b16 %v867
        %v1000 = vunpack.c.h.b16 %v867
        %v1001 = vunpack.c.l.b16 %v868
        %v1002 = vunpack.c.h.b16 %v868
        %v1003 = vunpack.c.l.b16 %v869
        %v1004 = vunpack.c.h.b16 %v869
        %v1005 = vunpack.c.l.b16 %v870
        %v1006 = vunpack.c.h.b16 %v870
        %v1007 = vunpack.c.l.b16 %v871
        %v1008 = vunpack.c.h.b16 %v871
        %v1009 = vunpack.c.l.b16 %v872
        %v1010 = vunpack.c.h.b16 %v872
        %v1011 = vunpack.c.l.b16 %v873
        %v1012 = vunpack.c.h.b16 %v873
        %v1013 = vunpack.c.l.b16 %v874
        %v1014 = vunpack.c.h.b16 %v874
        %v1015 = vunpack.c.l.b16 %v875
        %v1016 = vunpack.c.h.b16 %v875
        %v1017 = vunpack.c.l.b16 %v876
        %v1018 = vunpack.c.h.b16 %v876
        %v1019 = vunpack.c.l.b16 %v877
        %v1020 = vunpack.c.h.b16 %v877
        %v1021 = vunpack.c.l.b16 %v878
        %v1022 = vunpack.c.h.b16 %v878
        %v1023 = vunpack.c.l.b16 %v879
        %v1024 = vunpack.c.h.b16 %v879
        %v1025 = vunpack.c.l.b16 %v880
        %v1026 = vunpack.c.h.b16 %v880
        %v1027 = vunpack.c.l.b16 %v881
        %v1028 = vunpack.c.h.b16 %v881
        %v1029 = vunpack.c.l.b16 %v882
        %v1030 = vunpack.c.h.b16 %v882
        %v1031 = vunpack.c.l.b16 %v883
        %v1032 = vunpack.c.h.b16 %v883
        %v1033 = vunpack.c.l.b16 %v884
        %v1034 = vunpack.c.h.b16 %v884
        %v1035 = vunpack.c.l.b16 %v885
        %v1036 = vunpack.c.h.b16 %v885
        %v1037 = vunpack.c.l.b16 %v886
        %v1038 = vunpack.c.h.b16 %v886
        %v1039 = vunpack.c.l.b16 %v887
        %v1040 = vunpack.c.h.b16 %v887
        %v1041 = vunpack.c.l.b16 %v888
        %v1042 = vunpack.c.h.b16 %v888
        %v1043 = vunpack.c.l.b16 %v889
        %v1044 = vunpack.c.h.b16 %v889
        %v1045 = vunpack.c.l.b16 %v890
        %v1046 = vunpack.c.h.b16 %v890
        %v1047 = vunpack.c.l.b16 %v891
        %v1048 = vunpack.c.h.b16 %v891
        %v1049 = vunpack.c.l.b16 %v892
        %v1050 = vunpack.c.h.b16 %v892
        %v1051 = vunpack.c.l.b16 %v893
        %v1052 = vunpack.c.h.b16 %v893
        %v1053 = vunpack.c.l.b16 %v894
        %v1054 = vunpack.c.h.b16 %v894
        %v1055 = vunpack.c.l.b16 %v895
        %v1056 = vunpack.c.h.b16 %v895
        %v1057 = vunpack.c.l.b16 %v896
        %v1058 = vunpack.c.h.b16 %v896
        %v1059 = vunpack.c.l.b16 %v897
        %v1060 = vunpack.c.h.b16 %v897
        %v1061 = vunpack.c.l.b16 %v898
        %v1062 = vunpack.c.h.b16 %v898
        %v1063 = vunpack.c.l.b16 %v899
        %v1064 = vunpack.c.h.b16 %v899
        %v1065 = vunpack.c.l.b16 %v900
        %v1066 = vunpack.c.h.b16 %v900
        %v1067 = vunpack.c.l.b16 %v901
        %v1068 = vunpack.c.h.b16 %v901
        %v1069 = vunpack.c.l.b16 %v902
        %v1070 = vunpack.c.h.b16 %v902
        %v1071 = vunpack.c.l.b16 %v903
        %v1072 = vunpack.c.h.b16 %v903
        %v1073 = vunpack.c.l.b16 %v904
        %v1074 = vunpack.c.h.b16 %v904
        %v1075 = vunpack.c.l.b16 %v905
        %v1076 = vunpack.c.h.b16 %v905
        %v1077 = vunpack.c.l.b16 %v906
        %v1078 = vunpack.c.h.b16 %v906
        %v1079 = vunpack.c.l.b16 %v907
        %v1080 = vunpack.c.h.b16 %v907
        %v1081 = vunpack.c.l.b16 %v908
        %v1082 = vunpack.c.h.b16 %v908
        %v1083 = vunpack.c.l.b16 %v909
        %v1084 = vunpack.c.h.b16 %v909
        %v1085 = vunpack.c.l.b16 %v910
        %v1086 = vunpack.c.h.b16 %v910
        %v1087 = vunpack.c.l.b16 %v911
        %v1088 = vunpack.c.h.b16 %v911
        %v1089 = vunpack.c.l.b16 %v912
        %v1090 = vunpack.c.h.b16 %v912
        %v1091 = vunpack.c.l.b16 %v913
        %v1092 = vunpack.c.h.b16 %v913
        %v1093 = vunpack.c.l.b16 %v914
        %v1094 = vunpack.c.h.b16 %v914
        %v1095 = vunpack.c.l.b16 %v915
        %v1096 = vunpack.c.h.b16 %v915
        %v1097 = vunpack.c.l.b16 %v916
        %v1098 = vunpack.c.h.b16 %v916
        %v1099 = vunpack.c.l.b16 %v917
        %v1100 = vunpack.c.h.b16 %v917
        %v1101 = vunpack.c.l.b16 %v918
        %v1102 = vunpack.c.h.b16 %v918
        %v1103 = vunpack.c.l.b16 %v919
        %v1104 = vunpack.c.h.b16 %v919
        %v1105 = vunpack.c.l.b16 %v920
        %v1106 = vunpack.c.h.b16 %v920
        %v1107 = vunpack.c.l.b16 %v921
        %v1108 = vunpack.c.h.b16 %v921
        %v1109 = vunpack.c.l.b16 %v922
        %v1110 = vunpack.c.h.b16 %v922
        %v1111 = vunpack.c.l.b16 %v923
        %v1112 = vunpack.c.h.b16 %v923
        %v1113 = vunpack.c.l.b16 %v924
        %v1114 = vunpack.c.h.b16 %v924
        %v1115 = vunpack.c.l.b16 %v925
        %v1116 = vunpack.c.h.b16 %v925
        %v1117 = vunpack.c.l.b16 %v926
        %v1118 = vunpack.c.h.b16 %v926
        %v1119 = vpack.c.b16 %v993, %v991
        %v1120 = vpack.c.b16 %v994, %v992
        %v1121 = vpack.c.b16 %v997, %v995
        %v1122 = vpack.c.b16 %v998, %v996
        %v1123 = vpack.c.b16 %v1001, %v999
        %v1124 = vpack.c.b16 %v1002, %v1000
        %v1125 = vpack.c.b16 %v1005, %v1003
        %v1126 = vpack.c.b16 %v1006, %v1004
        %v1127 = vpack.c.b16 %v1009, %v1007
        %v1128 = vpack.c.b16 %v1010, %v1008
        %v1129 = vpack.c.b16 %v1013, %v1011
        %v1130 = vpack.c.b16 %v1014, %v1012
        %v1131 = vpack.c.b16 %v1017, %v1015
        %v1132 = vpack.c.b16 %v1018, %v1016
        %v1133 = vpack.c.b16 %v1021, %v1019
        %v1134 = vpack.c.b16 %v1022, %v1020
        %v1135 = vpack.c.b16 %v1025, %v1023
        %v1136 = vpack.c.b16 %v1026, %v1024
        %v1137 = vpack.c.b16 %v1029, %v1027
        %v1138 = vpack.c.b16 %v1030, %v1028
        %v1139 = vpack.c.b16 %v1033, %v1031
        %v1140 = vpack.c.b16 %v1034, %v1032
        %v1141 = vpack.c.b16 %v1037, %v1035
        %v1142 = vpack.c.b16 %v1038, %v1036
        %v1143 = vpack.c.b16 %v1041, %v1039
        %v1144 = vpack.c.b16 %v1042, %v1040
        %v1145 = vpack.c.b16 %v1045, %v1043
        %v1146 = vpack.c.b16 %v1046, %v1044
        %v1147 = vpack.c.b16 %v1049, %v1047
        %v1148 = vpack.c.b16 %v1050, %v1048
        %v1149 = vpack.c.b16 %v1053, %v1051
        %v1150 = vpack.c.b16 %v1054, %v1052
        %v1151 = vpack.c.b16 %v1057, %v1055
        %v1152 = vpack.c.b16 %v1058, %v1056
        %v1153 = vpack.c.b16 %v1061, %v1059
        %v1154 = vpack.c.b16 %v1062, %v1060
        %v1155 = vpack.c.b16 %v1065, %v1063
        %v1156 = vpack.c.b16 %v1066, %v1064
        %v1157 = vpack.c.b16 %v1069, %v1067
        %v1158 = vpack.c.b16 %v1070, %v1068
        %v1159 = vpack.c.b16 %v1073, %v1071
        %v1160 = vpack.c.b16 %v1074, %v1072
        %v1161 = vpack.c.b16 %v1077, %v1075
        %v1162 = vpack.c.b16 %v1078, %v1076
        %v1163 = vpack.c.b16 %v1081, %v1079
        %v1164 = vpack.c.b16 %v1082, %v1080
        %v1165 = vpack.c.b16 %v1085, %v1083
        %v1166 = vpack.c.b16 %v1086, %v1084
        %v1167 = vpack.c.b16 %v1089, %v1087
        %v1168 = vpack.c.b16 %v1090, %v1088
        %v1169 = vpack.c.b16 %v1093, %v1091
        %v1170 = vpack.c.b16 %v1094, %v1092
        %v1171 = vpack.c.b16 %v1097, %v1095
        %v1172 = vpack.c.b16 %v1098, %v1096
        %v1173 = vpack.c.b16 %v1101, %v1099
        %v1174 = vpack.c.b16 %v1102, %v1100
        %v1175 = vpack.c.b16 %v1105, %v1103
        %v1176 = vpack.c.b16 %v1106, %v1104
        %v1177 = vpack.c.b16 %v1109, %v1107
        %v1178 = vpack.c.b16 %v1110, %v1108
        %v1179 = vpack.c.b16 %v1113, %v1111
        %v1180 = vpack.c.b16 %v1114, %v1112
        %v1181 = vpack.c.b16 %v1117, %v1115
        %v1182 = vpack.c.b16 %v1118, %v1116
        %1247 = vmatpush.bf16.msra.mxu0 %v1133
        %1248 = vmatpush.bf16.msra.mxu0 %v1131
        %1249 = vmatpush.bf16.msra.mxu0 %v1129
        %1250 = vmatpush.bf16.msra.mxu0 %v1127
        %1251 = vmatpush.bf16.msra.mxu0 %v1125
        %1252 = vmatpush.bf16.msra.mxu0 %v1123
        %1253 = vmatpush.bf16.msra.mxu0 %v1121
        %1254 = vmatpush.bf16.msra.mxu0 %v1119
        %1255 = vmatmul.bf16.gmra.mxu0 %v366
        %v1256 = vpop.f32.mrf.mxu0
        %v1257 = vadd.f32 0.0, %v1256
        %v1258 = vpop.f32.mrf.mxu0
        %v1259 = vadd.f32 0.0, %v1258
        %1260 = vmatmul.bf16.gmra.mxu0 %v370
        %v1261 = vpop.f32.mrf.mxu0
        %v1262 = vadd.f32 0.0, %v1261
        %v1263 = vpop.f32.mrf.mxu0
        %v1264 = vadd.f32 0.0, %v1263
        %1265 = vdwg.mxu0
        %1266 = vmatpush.bf16.msra.mxu0 %v1149
        %1267 = vmatpush.bf16.msra.mxu0 %v1147
        %1268 = vmatpush.bf16.msra.mxu0 %v1145
        %1269 = vmatpush.bf16.msra.mxu0 %v1143
        %1270 = vmatpush.bf16.msra.mxu0 %v1141
        %1271 = vmatpush.bf16.msra.mxu0 %v1139
        %1272 = vmatpush.bf16.msra.mxu0 %v1137
        %1273 = vmatpush.bf16.msra.mxu0 %v1135
        %1274 = vmatmul.bf16.gmra.mxu0 %v367
        %v1275 = vpop.f32.mrf.mxu0
        %v1276 = vadd.f32 %v1257, %v1275
        %v1277 = vpop.f32.mrf.mxu0
        %v1278 = vadd.f32 %v1259, %v1277
        %1279 = vmatmul.bf16.gmra.mxu0 %v371
        %v1280 = vpop.f32.mrf.mxu0
        %v1281 = vadd.f32 %v1262, %v1280
        %v1282 = vpop.f32.mrf.mxu0
        %v1283 = vadd.f32 %v1264, %v1282
        %1284 = vdwg.mxu0
        %1285 = vmatpush.bf16.msra.mxu0 %v1165
        %1286 = vmatpush.bf16.msra.mxu0 %v1163
        %1287 = vmatpush.bf16.msra.mxu0 %v1161
        %1288 = vmatpush.bf16.msra.mxu0 %v1159
        %1289 = vmatpush.bf16.msra.mxu0 %v1157
        %1290 = vmatpush.bf16.msra.mxu0 %v1155
        %1291 = vmatpush.bf16.msra.mxu0 %v1153
        %1292 = vmatpush.bf16.msra.mxu0 %v1151
        %1293 = vmatmul.bf16.gmra.mxu0 %v368
        %v1294 = vpop.f32.mrf.mxu0
        %v1295 = vadd.f32 %v1276, %v1294
        %v1296 = vpop.f32.mrf.mxu0
        %v1297 = vadd.f32 %v1278, %v1296
        %1298 = vmatmul.bf16.gmra.mxu0 %v372
        %v1299 = vpop.f32.mrf.mxu0
        %v1300 = vadd.f32 %v1281, %v1299
        %v1301 = vpop.f32.mrf.mxu0
        %v1302 = vadd.f32 %v1283, %v1301
        %1303 = vdwg.mxu0
        %1304 = vmatpush.bf16.msra.mxu0 %v1181
        %1305 = vmatpush.bf16.msra.mxu0 %v1179
        %1306 = vmatpush.bf16.msra.mxu0 %v1177
        %1307 = vmatpush.bf16.msra.mxu0 %v1175
        %1308 = vmatpush.bf16.msra.mxu0 %v1173
        %1309 = vmatpush.bf16.msra.mxu0 %v1171
        %1310 = vmatpush.bf16.msra.mxu0 %v1169
        %1311 = vmatpush.bf16.msra.mxu0 %v1167
        %1312 = vmatmul.bf16.gmra.mxu0 %v369
        %v1313 = vpop.f32.mrf.mxu0
        %v1314 = vadd.f32 %v1295, %v1313
        %v1315 = vpop.f32.mrf.mxu0
        %v1316 = vadd.f32 %v1297, %v1315
        %1317 = vmatmul.bf16.gmra.mxu0 %v373
        %v1318 = vpop.f32.mrf.mxu0
        %v1319 = vadd.f32 %v1300, %v1318
        %v1320 = vpop.f32.mrf.mxu0
        %v1321 = vadd.f32 %v1302, %v1320
        %1322 = vdwg.mxu0
        %1323 = vmatpush.bf16.msra.mxu0 %v1134
        %1324 = vmatpush.bf16.msra.mxu0 %v1132
        %1325 = vmatpush.bf16.msra.mxu0 %v1130
        %1326 = vmatpush.bf16.msra.mxu0 %v1128
        %1327 = vmatpush.bf16.msra.mxu0 %v1126
        %1328 = vmatpush.bf16.msra.mxu0 %v1124
        %1329 = vmatpush.bf16.msra.mxu0 %v1122
        %1330 = vmatpush.bf16.msra.mxu0 %v1120
        %1331 = vmatmul.bf16.gmra.mxu0 %v366
        %v1332 = vpop.f32.mrf.mxu0
        %v1333 = vadd.f32 0.0, %v1332
        %v1334 = vpop.f32.mrf.mxu0
        %v1335 = vadd.f32 0.0, %v1334
        %1336 = vmatmul.bf16.gmra.mxu0 %v370
        %v1337 = vpop.f32.mrf.mxu0
        %v1338 = vadd.f32 0.0, %v1337
        %v1339 = vpop.f32.mrf.mxu0
        %v1340 = vadd.f32 0.0, %v1339
        %1341 = vdwg.mxu0
        %1342 = vmatpush.bf16.msra.mxu0 %v1150
        %1343 = vmatpush.bf16.msra.mxu0 %v1148
        %1344 = vmatpush.bf16.msra.mxu0 %v1146
        %1345 = vmatpush.bf16.msra.mxu0 %v1144
        %1346 = vmatpush.bf16.msra.mxu0 %v1142
        %1347 = vmatpush.bf16.msra.mxu0 %v1140
        %1348 = vmatpush.bf16.msra.mxu0 %v1138
        %1349 = vmatpush.bf16.msra.mxu0 %v1136
        %1350 = vmatmul.bf16.gmra.mxu0 %v367
        %v1351 = vpop.f32.mrf.mxu0
        %v1352 = vadd.f32 %v1333, %v1351
        %v1353 = vpop.f32.mrf.mxu0
        %v1354 = vadd.f32 %v1335, %v1353
        %1355 = vmatmul.bf16.gmra.mxu0 %v371
        %v1356 = vpop.f32.mrf.mxu0
        %v1357 = vadd.f32 %v1338, %v1356
        %v1358 = vpop.f32.mrf.mxu0
        %v1359 = vadd.f32 %v1340, %v1358
        %1360 = vdwg.mxu0
        %1361 = vmatpush.bf16.msra.mxu0 %v1166
        %1362 = vmatpush.bf16.msra.mxu0 %v1164
        %1363 = vmatpush.bf16.msra.mxu0 %v1162
        %1364 = vmatpush.bf16.msra.mxu0 %v1160
        %1365 = vmatpush.bf16.msra.mxu0 %v1158
        %1366 = vmatpush.bf16.msra.mxu0 %v1156
        %1367 = vmatpush.bf16.msra.mxu0 %v1154
        %1368 = vmatpush.bf16.msra.mxu0 %v1152
        %1369 = vmatmul.bf16.gmra.mxu0 %v368
        %v1370 = vpop.f32.mrf.mxu0
        %v1371 = vadd.f32 %v1352, %v1370
        %v1372 = vpop.f32.mrf.mxu0
        %v1373 = vadd.f32 %v1354, %v1372
        %1374 = vmatmul.bf16.gmra.mxu0 %v372
        %v1375 = vpop.f32.mrf.mxu0
        %v1376 = vadd.f32 %v1357, %v1375
        %v1377 = vpop.f32.mrf.mxu0
        %v1378 = vadd.f32 %v1359, %v1377
        %1379 = vdwg.mxu0
        %1380 = vmatpush.bf16.msra.mxu0 %v1182
        %1381 = vmatpush.bf16.msra.mxu0 %v1180
        %1382 = vmatpush.bf16.msra.mxu0 %v1178
        %1383 = vmatpush.bf16.msra.mxu0 %v1176
        %1384 = vmatpush.bf16.msra.mxu0 %v1174
        %1385 = vmatpush.bf16.msra.mxu0 %v1172
        %1386 = vmatpush.bf16.msra.mxu0 %v1170
        %1387 = vmatpush.bf16.msra.mxu0 %v1168
        %1388 = vmatmul.bf16.gmra.mxu0 %v369
        %v1389 = vpop.f32.mrf.mxu0
        %v1390 = vadd.f32 %v1371, %v1389
        %v1391 = vpop.f32.mrf.mxu0
        %v1392 = vadd.f32 %v1373, %v1391
        %1393 = vmatmul.bf16.gmra.mxu0 %v373
        %v1394 = vpop.f32.mrf.mxu0
        %v1395 = vadd.f32 %v1376, %v1394
        %v1396 = vpop.f32.mrf.mxu0
        %v1397 = vadd.f32 %v1378, %v1396
        %1398 = vdwg.mxu0
        %1399 = vst [vmem:[#allocation2 + $0x40] sm:$0xff] %v1314
        %1400 = vst [vmem:[#allocation2 + $0x48] sm:$0xff] %v1390
        %1401 = vst [vmem:[#allocation2 + $0x50] sm:$0xff] %v1316
        %1402 = vst [vmem:[#allocation2 + $0x58] sm:$0xff] %v1392
        %1403 = vst [vmem:[#allocation2 + $0x60] sm:$0xff] %v1319
        %1404 = vst [vmem:[#allocation2 + $0x68] sm:$0xff] %v1395
        %1405 = vst [vmem:[#allocation2 + $0x70] sm:$0xff] %v1321
        %1406 = vst [vmem:[#allocation2 + $0x78] sm:$0xff] %v1397
        %s1407 = scalar_lea.vmem %s227, 1024 [#allocation5]
        %v1408 = vld [vmem:[%s1407] sm:$0xff]
        %v1409 = vld [vmem:[%s1407 + $0x8] sm:$0xff]
        %v1410 = vld [vmem:[%s1407 + $0x10] sm:$0xff]
        %v1411 = vld [vmem:[%s1407 + $0x18] sm:$0xff]
        %v1412 = vld [vmem:[%s1407 + $0x20] sm:$0xff]
        %v1413 = vld [vmem:[%s1407 + $0x28] sm:$0xff]
        %v1414 = vld [vmem:[%s1407 + $0x30] sm:$0xff]
        %v1415 = vld [vmem:[%s1407 + $0x38] sm:$0xff]
        %v1416 = vld [vmem:[%s1407 + $0x40] sm:$0xff]
        %v1417 = vld [vmem:[%s1407 + $0x48] sm:$0xff]
        %v1418 = vld [vmem:[%s1407 + $0x50] sm:$0xff]
        %v1419 = vld [vmem:[%s1407 + $0x58] sm:$0xff]
        %v1420 = vld [vmem:[%s1407 + $0x60] sm:$0xff]
        %v1421 = vld [vmem:[%s1407 + $0x68] sm:$0xff]
        %v1422 = vld [vmem:[%s1407 + $0x70] sm:$0xff]
        %v1423 = vld [vmem:[%s1407 + $0x78] sm:$0xff]
        %v1424 = vld [vmem:[%s1407 + $0x80] sm:$0xff]
        %v1425 = vld [vmem:[%s1407 + $0x88] sm:$0xff]
        %v1426 = vld [vmem:[%s1407 + $0x90] sm:$0xff]
        %v1427 = vld [vmem:[%s1407 + $0x98] sm:$0xff]
        %v1428 = vld [vmem:[%s1407 + $0xa0] sm:$0xff]
        %v1429 = vld [vmem:[%s1407 + $0xa8] sm:$0xff]
        %v1430 = vld [vmem:[%s1407 + $0xb0] sm:$0xff]
        %v1431 = vld [vmem:[%s1407 + $0xb8] sm:$0xff]
        %v1432 = vld [vmem:[%s1407 + $0xc0] sm:$0xff]
        %v1433 = vld [vmem:[%s1407 + $0xc8] sm:$0xff]
        %v1434 = vld [vmem:[%s1407 + $0xd0] sm:$0xff]
        %v1435 = vld [vmem:[%s1407 + $0xd8] sm:$0xff]
        %v1436 = vld [vmem:[%s1407 + $0xe0] sm:$0xff]
        %v1437 = vld [vmem:[%s1407 + $0xe8] sm:$0xff]
        %v1438 = vld [vmem:[%s1407 + $0xf0] sm:$0xff]
        %v1439 = vld [vmem:[%s1407 + $0xf8] sm:$0xff]
        %v1440 = vld [vmem:[%s1407 + $0x100] sm:$0xff]
        %v1441 = vld [vmem:[%s1407 + $0x108] sm:$0xff]
        %v1442 = vld [vmem:[%s1407 + $0x110] sm:$0xff]
        %v1443 = vld [vmem:[%s1407 + $0x118] sm:$0xff]
        %v1444 = vld [vmem:[%s1407 + $0x120] sm:$0xff]
        %v1445 = vld [vmem:[%s1407 + $0x128] sm:$0xff]
        %v1446 = vld [vmem:[%s1407 + $0x130] sm:$0xff]
        %v1447 = vld [vmem:[%s1407 + $0x138] sm:$0xff]
        %v1448 = vld [vmem:[%s1407 + $0x140] sm:$0xff]
        %v1449 = vld [vmem:[%s1407 + $0x148] sm:$0xff]
        %v1450 = vld [vmem:[%s1407 + $0x150] sm:$0xff]
        %v1451 = vld [vmem:[%s1407 + $0x158] sm:$0xff]
        %v1452 = vld [vmem:[%s1407 + $0x160] sm:$0xff]
        %v1453 = vld [vmem:[%s1407 + $0x168] sm:$0xff]
        %v1454 = vld [vmem:[%s1407 + $0x170] sm:$0xff]
        %v1455 = vld [vmem:[%s1407 + $0x178] sm:$0xff]
        %v1456 = vld [vmem:[%s1407 + $0x180] sm:$0xff]
        %v1457 = vld [vmem:[%s1407 + $0x188] sm:$0xff]
        %v1458 = vld [vmem:[%s1407 + $0x190] sm:$0xff]
        %v1459 = vld [vmem:[%s1407 + $0x198] sm:$0xff]
        %v1460 = vld [vmem:[%s1407 + $0x1a0] sm:$0xff]
        %v1461 = vld [vmem:[%s1407 + $0x1a8] sm:$0xff]
        %v1462 = vld [vmem:[%s1407 + $0x1b0] sm:$0xff]
        %v1463 = vld [vmem:[%s1407 + $0x1b8] sm:$0xff]
        %v1464 = vld [vmem:[%s1407 + $0x1c0] sm:$0xff]
        %v1465 = vld [vmem:[%s1407 + $0x1c8] sm:$0xff]
        %v1466 = vld [vmem:[%s1407 + $0x1d0] sm:$0xff]
        %v1467 = vld [vmem:[%s1407 + $0x1d8] sm:$0xff]
        %v1468 = vld [vmem:[%s1407 + $0x1e0] sm:$0xff]
        %v1469 = vld [vmem:[%s1407 + $0x1e8] sm:$0xff]
        %v1470 = vld [vmem:[%s1407 + $0x1f0] sm:$0xff]
        %v1471 = vld [vmem:[%s1407 + $0x1f8] sm:$0xff]
        %v1536 = vunpack.c.l.b16 %v1408
        %v1537 = vunpack.c.h.b16 %v1408
        %v1538 = vunpack.c.l.b16 %v1409
        %v1539 = vunpack.c.h.b16 %v1409
        %v1540 = vunpack.c.l.b16 %v1410
        %v1541 = vunpack.c.h.b16 %v1410
        %v1542 = vunpack.c.l.b16 %v1411
        %v1543 = vunpack.c.h.b16 %v1411
        %v1544 = vunpack.c.l.b16 %v1412
        %v1545 = vunpack.c.h.b16 %v1412
        %v1546 = vunpack.c.l.b16 %v1413
        %v1547 = vunpack.c.h.b16 %v1413
        %v1548 = vunpack.c.l.b16 %v1414
        %v1549 = vunpack.c.h.b16 %v1414
        %v1550 = vunpack.c.l.b16 %v1415
        %v1551 = vunpack.c.h.b16 %v1415
        %v1552 = vunpack.c.l.b16 %v1416
        %v1553 = vunpack.c.h.b16 %v1416
        %v1554 = vunpack.c.l.b16 %v1417
        %v1555 = vunpack.c.h.b16 %v1417
        %v1556 = vunpack.c.l.b16 %v1418
        %v1557 = vunpack.c.h.b16 %v1418
        %v1558 = vunpack.c.l.b16 %v1419
        %v1559 = vunpack.c.h.b16 %v1419
        %v1560 = vunpack.c.l.b16 %v1420
        %v1561 = vunpack.c.h.b16 %v1420
        %v1562 = vunpack.c.l.b16 %v1421
        %v1563 = vunpack.c.h.b16 %v1421
        %v1564 = vunpack.c.l.b16 %v1422
        %v1565 = vunpack.c.h.b16 %v1422
        %v1566 = vunpack.c.l.b16 %v1423
        %v1567 = vunpack.c.h.b16 %v1423
        %v1568 = vunpack.c.l.b16 %v1424
        %v1569 = vunpack.c.h.b16 %v1424
        %v1570 = vunpack.c.l.b16 %v1425
        %v1571 = vunpack.c.h.b16 %v1425
        %v1572 = vunpack.c.l.b16 %v1426
        %v1573 = vunpack.c.h.b16 %v1426
        %v1574 = vunpack.c.l.b16 %v1427
        %v1575 = vunpack.c.h.b16 %v1427
        %v1576 = vunpack.c.l.b16 %v1428
        %v1577 = vunpack.c.h.b16 %v1428
        %v1578 = vunpack.c.l.b16 %v1429
        %v1579 = vunpack.c.h.b16 %v1429
        %v1580 = vunpack.c.l.b16 %v1430
        %v1581 = vunpack.c.h.b16 %v1430
        %v1582 = vunpack.c.l.b16 %v1431
        %v1583 = vunpack.c.h.b16 %v1431
        %v1584 = vunpack.c.l.b16 %v1432
        %v1585 = vunpack.c.h.b16 %v1432
        %v1586 = vunpack.c.l.b16 %v1433
        %v1587 = vunpack.c.h.b16 %v1433
        %v1588 = vunpack.c.l.b16 %v1434
        %v1589 = vunpack.c.h.b16 %v1434
        %v1590 = vunpack.c.l.b16 %v1435
        %v1591 = vunpack.c.h.b16 %v1435
        %v1592 = vunpack.c.l.b16 %v1436
        %v1593 = vunpack.c.h.b16 %v1436
        %v1594 = vunpack.c.l.b16 %v1437
        %v1595 = vunpack.c.h.b16 %v1437
        %v1596 = vunpack.c.l.b16 %v1438
        %v1597 = vunpack.c.h.b16 %v1438
        %v1598 = vunpack.c.l.b16 %v1439
        %v1599 = vunpack.c.h.b16 %v1439
        %v1600 = vunpack.c.l.b16 %v1440
        %v1601 = vunpack.c.h.b16 %v1440
        %v1602 = vunpack.c.l.b16 %v1441
        %v1603 = vunpack.c.h.b16 %v1441
        %v1604 = vunpack.c.l.b16 %v1442
        %v1605 = vunpack.c.h.b16 %v1442
        %v1606 = vunpack.c.l.b16 %v1443
        %v1607 = vunpack.c.h.b16 %v1443
        %v1608 = vunpack.c.l.b16 %v1444
        %v1609 = vunpack.c.h.b16 %v1444
        %v1610 = vunpack.c.l.b16 %v1445
        %v1611 = vunpack.c.h.b16 %v1445
        %v1612 = vunpack.c.l.b16 %v1446
        %v1613 = vunpack.c.h.b16 %v1446
        %v1614 = vunpack.c.l.b16 %v1447
        %v1615 = vunpack.c.h.b16 %v1447
        %v1616 = vunpack.c.l.b16 %v1448
        %v1617 = vunpack.c.h.b16 %v1448
        %v1618 = vunpack.c.l.b16 %v1449
        %v1619 = vunpack.c.h.b16 %v1449
        %v1620 = vunpack.c.l.b16 %v1450
        %v1621 = vunpack.c.h.b16 %v1450
        %v1622 = vunpack.c.l.b16 %v1451
        %v1623 = vunpack.c.h.b16 %v1451
        %v1624 = vunpack.c.l.b16 %v1452
        %v1625 = vunpack.c.h.b16 %v1452
        %v1626 = vunpack.c.l.b16 %v1453
        %v1627 = vunpack.c.h.b16 %v1453
        %v1628 = vunpack.c.l.b16 %v1454
        %v1629 = vunpack.c.h.b16 %v1454
        %v1630 = vunpack.c.l.b16 %v1455
        %v1631 = vunpack.c.h.b16 %v1455
        %v1632 = vunpack.c.l.b16 %v1456
        %v1633 = vunpack.c.h.b16 %v1456
        %v1634 = vunpack.c.l.b16 %v1457
        %v1635 = vunpack.c.h.b16 %v1457
        %v1636 = vunpack.c.l.b16 %v1458
        %v1637 = vunpack.c.h.b16 %v1458
        %v1638 = vunpack.c.l.b16 %v1459
        %v1639 = vunpack.c.h.b16 %v1459
        %v1640 = vunpack.c.l.b16 %v1460
        %v1641 = vunpack.c.h.b16 %v1460
        %v1642 = vunpack.c.l.b16 %v1461
        %v1643 = vunpack.c.h.b16 %v1461
        %v1644 = vunpack.c.l.b16 %v1462
        %v1645 = vunpack.c.h.b16 %v1462
        %v1646 = vunpack.c.l.b16 %v1463
        %v1647 = vunpack.c.h.b16 %v1463
        %v1648 = vunpack.c.l.b16 %v1464
        %v1649 = vunpack.c.h.b16 %v1464
        %v1650 = vunpack.c.l.b16 %v1465
        %v1651 = vunpack.c.h.b16 %v1465
        %v1652 = vunpack.c.l.b16 %v1466
        %v1653 = vunpack.c.h.b16 %v1466
        %v1654 = vunpack.c.l.b16 %v1467
        %v1655 = vunpack.c.h.b16 %v1467
        %v1656 = vunpack.c.l.b16 %v1468
        %v1657 = vunpack.c.h.b16 %v1468
        %v1658 = vunpack.c.l.b16 %v1469
        %v1659 = vunpack.c.h.b16 %v1469
        %v1660 = vunpack.c.l.b16 %v1470
        %v1661 = vunpack.c.h.b16 %v1470
        %v1662 = vunpack.c.l.b16 %v1471
        %v1663 = vunpack.c.h.b16 %v1471
        %v1664 = vpack.c.b16 %v1538, %v1536
        %v1665 = vpack.c.b16 %v1539, %v1537
        %v1666 = vpack.c.b16 %v1542, %v1540
        %v1667 = vpack.c.b16 %v1543, %v1541
        %v1668 = vpack.c.b16 %v1546, %v1544
        %v1669 = vpack.c.b16 %v1547, %v1545
        %v1670 = vpack.c.b16 %v1550, %v1548
        %v1671 = vpack.c.b16 %v1551, %v1549
        %v1672 = vpack.c.b16 %v1554, %v1552
        %v1673 = vpack.c.b16 %v1555, %v1553
        %v1674 = vpack.c.b16 %v1558, %v1556
        %v1675 = vpack.c.b16 %v1559, %v1557
        %v1676 = vpack.c.b16 %v1562, %v1560
        %v1677 = vpack.c.b16 %v1563, %v1561
        %v1678 = vpack.c.b16 %v1566, %v1564
        %v1679 = vpack.c.b16 %v1567, %v1565
        %v1680 = vpack.c.b16 %v1570, %v1568
        %v1681 = vpack.c.b16 %v1571, %v1569
        %v1682 = vpack.c.b16 %v1574, %v1572
        %v1683 = vpack.c.b16 %v1575, %v1573
        %v1684 = vpack.c.b16 %v1578, %v1576
        %v1685 = vpack.c.b16 %v1579, %v1577
        %v1686 = vpack.c.b16 %v1582, %v1580
        %v1687 = vpack.c.b16 %v1583, %v1581
        %v1688 = vpack.c.b16 %v1586, %v1584
        %v1689 = vpack.c.b16 %v1587, %v1585
        %v1690 = vpack.c.b16 %v1590, %v1588
        %v1691 = vpack.c.b16 %v1591, %v1589
        %v1692 = vpack.c.b16 %v1594, %v1592
        %v1693 = vpack.c.b16 %v1595, %v1593
        %v1694 = vpack.c.b16 %v1598, %v1596
        %v1695 = vpack.c.b16 %v1599, %v1597
        %v1696 = vpack.c.b16 %v1602, %v1600
        %v1697 = vpack.c.b16 %v1603, %v1601
        %v1698 = vpack.c.b16 %v1606, %v1604
        %v1699 = vpack.c.b16 %v1607, %v1605
        %v1700 = vpack.c.b16 %v1610, %v1608
        %v1701 = vpack.c.b16 %v1611, %v1609
        %v1702 = vpack.c.b16 %v1614, %v1612
        %v1703 = vpack.c.b16 %v1615, %v1613
        %v1704 = vpack.c.b16 %v1618, %v1616
        %v1705 = vpack.c.b16 %v1619, %v1617
        %v1706 = vpack.c.b16 %v1622, %v1620
        %v1707 = vpack.c.b16 %v1623, %v1621
        %v1708 = vpack.c.b16 %v1626, %v1624
        %v1709 = vpack.c.b16 %v1627, %v1625
        %v1710 = vpack.c.b16 %v1630, %v1628
        %v1711 = vpack.c.b16 %v1631, %v1629
        %v1712 = vpack.c.b16 %v1634, %v1632
        %v1713 = vpack.c.b16 %v1635, %v1633
        %v1714 = vpack.c.b16 %v1638, %v1636
        %v1715 = vpack.c.b16 %v1639, %v1637
        %v1716 = vpack.c.b16 %v1642, %v1640
        %v1717 = vpack.c.b16 %v1643, %v1641
        %v1718 = vpack.c.b16 %v1646, %v1644
        %v1719 = vpack.c.b16 %v1647, %v1645
        %v1720 = vpack.c.b16 %v1650, %v1648
        %v1721 = vpack.c.b16 %v1651, %v1649
        %v1722 = vpack.c.b16 %v1654, %v1652
        %v1723 = vpack.c.b16 %v1655, %v1653
        %v1724 = vpack.c.b16 %v1658, %v1656
        %v1725 = vpack.c.b16 %v1659, %v1657
        %v1726 = vpack.c.b16 %v1662, %v1660
        %v1727 = vpack.c.b16 %v1663, %v1661
        %1792 = vmatpush.bf16.msra.mxu0 %v1678
        %1793 = vmatpush.bf16.msra.mxu0 %v1676
        %1794 = vmatpush.bf16.msra.mxu0 %v1674
        %1795 = vmatpush.bf16.msra.mxu0 %v1672
        %1796 = vmatpush.bf16.msra.mxu0 %v1670
        %1797 = vmatpush.bf16.msra.mxu0 %v1668
        %1798 = vmatpush.bf16.msra.mxu0 %v1666
        %1799 = vmatpush.bf16.msra.mxu0 %v1664
        %1800 = vmatmul.bf16.gmra.mxu0 %v366
        %v1801 = vpop.f32.mrf.mxu0
        %v1802 = vadd.f32 0.0, %v1801
        %v1803 = vpop.f32.mrf.mxu0
        %v1804 = vadd.f32 0.0, %v1803
        %1805 = vmatmul.bf16.gmra.mxu0 %v370
        %v1806 = vpop.f32.mrf.mxu0
        %v1807 = vadd.f32 0.0, %v1806
        %v1808 = vpop.f32.mrf.mxu0
        %v1809 = vadd.f32 0.0, %v1808
        %1810 = vdwg.mxu0
        %1811 = vmatpush.bf16.msra.mxu0 %v1694
        %1812 = vmatpush.bf16.msra.mxu0 %v1692
        %1813 = vmatpush.bf16.msra.mxu0 %v1690
        %1814 = vmatpush.bf16.msra.mxu0 %v1688
        %1815 = vmatpush.bf16.msra.mxu0 %v1686
        %1816 = vmatpush.bf16.msra.mxu0 %v1684
        %1817 = vmatpush.bf16.msra.mxu0 %v1682
        %1818 = vmatpush.bf16.msra.mxu0 %v1680
        %1819 = vmatmul.bf16.gmra.mxu0 %v367
        %v1820 = vpop.f32.mrf.mxu0
        %v1821 = vadd.f32 %v1802, %v1820
        %v1822 = vpop.f32.mrf.mxu0
        %v1823 = vadd.f32 %v1804, %v1822
        %1824 = vmatmul.bf16.gmra.mxu0 %v371
        %v1825 = vpop.f32.mrf.mxu0
        %v1826 = vadd.f32 %v1807, %v1825
        %v1827 = vpop.f32.mrf.mxu0
        %v1828 = vadd.f32 %v1809, %v1827
        %1829 = vdwg.mxu0
        %1830 = vmatpush.bf16.msra.mxu0 %v1710
        %1831 = vmatpush.bf16.msra.mxu0 %v1708
        %1832 = vmatpush.bf16.msra.mxu0 %v1706
        %1833 = vmatpush.bf16.msra.mxu0 %v1704
        %1834 = vmatpush.bf16.msra.mxu0 %v1702
        %1835 = vmatpush.bf16.msra.mxu0 %v1700
        %1836 = vmatpush.bf16.msra.mxu0 %v1698
        %1837 = vmatpush.bf16.msra.mxu0 %v1696
        %1838 = vmatmul.bf16.gmra.mxu0 %v368
        %v1839 = vpop.f32.mrf.mxu0
        %v1840 = vadd.f32 %v1821, %v1839
        %v1841 = vpop.f32.mrf.mxu0
        %v1842 = vadd.f32 %v1823, %v1841
        %1843 = vmatmul.bf16.gmra.mxu0 %v372
        %v1844 = vpop.f32.mrf.mxu0
        %v1845 = vadd.f32 %v1826, %v1844
        %v1846 = vpop.f32.mrf.mxu0
        %v1847 = vadd.f32 %v1828, %v1846
        %1848 = vdwg.mxu0
        %1849 = vmatpush.bf16.msra.mxu0 %v1726
        %1850 = vmatpush.bf16.msra.mxu0 %v1724
        %1851 = vmatpush.bf16.msra.mxu0 %v1722
        %1852 = vmatpush.bf16.msra.mxu0 %v1720
        %1853 = vmatpush.bf16.msra.mxu0 %v1718
        %1854 = vmatpush.bf16.msra.mxu0 %v1716
        %1855 = vmatpush.bf16.msra.mxu0 %v1714
        %1856 = vmatpush.bf16.msra.mxu0 %v1712
        %1857 = vmatmul.bf16.gmra.mxu0 %v369
        %v1858 = vpop.f32.mrf.mxu0
        %v1859 = vadd.f32 %v1840, %v1858
        %v1860 = vpop.f32.mrf.mxu0
        %v1861 = vadd.f32 %v1842, %v1860
        %1862 = vmatmul.bf16.gmra.mxu0 %v373
        %v1863 = vpop.f32.mrf.mxu0
        %v1864 = vadd.f32 %v1845, %v1863
        %v1865 = vpop.f32.mrf.mxu0
        %v1866 = vadd.f32 %v1847, %v1865
        %1867 = vdwg.mxu0
        %1868 = vmatpush.bf16.msra.mxu0 %v1679
        %1869 = vmatpush.bf16.msra.mxu0 %v1677
        %1870 = vmatpush.bf16.msra.mxu0 %v1675
        %1871 = vmatpush.bf16.msra.mxu0 %v1673
        %1872 = vmatpush.bf16.msra.mxu0 %v1671
        %1873 = vmatpush.bf16.msra.mxu0 %v1669
        %1874 = vmatpush.bf16.msra.mxu0 %v1667
        %1875 = vmatpush.bf16.msra.mxu0 %v1665
        %1876 = vmatmul.bf16.gmra.mxu0 %v366
        %v1877 = vpop.f32.mrf.mxu0
        %v1878 = vadd.f32 0.0, %v1877
        %v1879 = vpop.f32.mrf.mxu0
        %v1880 = vadd.f32 0.0, %v1879
        %1881 = vmatmul.bf16.gmra.mxu0 %v370
        %v1882 = vpop.f32.mrf.mxu0
        %v1883 = vadd.f32 0.0, %v1882
        %v1884 = vpop.f32.mrf.mxu0
        %v1885 = vadd.f32 0.0, %v1884
        %1886 = vdwg.mxu0
        %1887 = vmatpush.bf16.msra.mxu0 %v1695
        %1888 = vmatpush.bf16.msra.mxu0 %v1693
        %1889 = vmatpush.bf16.msra.mxu0 %v1691
        %1890 = vmatpush.bf16.msra.mxu0 %v1689
        %1891 = vmatpush.bf16.msra.mxu0 %v1687
        %1892 = vmatpush.bf16.msra.mxu0 %v1685
        %1893 = vmatpush.bf16.msra.mxu0 %v1683
        %1894 = vmatpush.bf16.msra.mxu0 %v1681
        %1895 = vmatmul.bf16.gmra.mxu0 %v367
        %v1896 = vpop.f32.mrf.mxu0
        %v1897 = vadd.f32 %v1878, %v1896
        %v1898 = vpop.f32.mrf.mxu0
        %v1899 = vadd.f32 %v1880, %v1898
        %1900 = vmatmul.bf16.gmra.mxu0 %v371
        %v1901 = vpop.f32.mrf.mxu0
        %v1902 = vadd.f32 %v1883, %v1901
        %v1903 = vpop.f32.mrf.mxu0
        %v1904 = vadd.f32 %v1885, %v1903
        %1905 = vdwg.mxu0
        %1906 = vmatpush.bf16.msra.mxu0 %v1711
        %1907 = vmatpush.bf16.msra.mxu0 %v1709
        %1908 = vmatpush.bf16.msra.mxu0 %v1707
        %1909 = vmatpush.bf16.msra.mxu0 %v1705
        %1910 = vmatpush.bf16.msra.mxu0 %v1703
        %1911 = vmatpush.bf16.msra.mxu0 %v1701
        %1912 = vmatpush.bf16.msra.mxu0 %v1699
        %1913 = vmatpush.bf16.msra.mxu0 %v1697
        %1914 = vmatmul.bf16.gmra.mxu0 %v368
        %v1915 = vpop.f32.mrf.mxu0
        %v1916 = vadd.f32 %v1897, %v1915
        %v1917 = vpop.f32.mrf.mxu0
        %v1918 = vadd.f32 %v1899, %v1917
        %1919 = vmatmul.bf16.gmra.mxu0 %v372
        %v1920 = vpop.f32.mrf.mxu0
        %v1921 = vadd.f32 %v1902, %v1920
        %v1922 = vpop.f32.mrf.mxu0
        %v1923 = vadd.f32 %v1904, %v1922
        %1924 = vdwg.mxu0
        %1925 = vmatpush.bf16.msra.mxu0 %v1727
        %1926 = vmatpush.bf16.msra.mxu0 %v1725
        %1927 = vmatpush.bf16.msra.mxu0 %v1723
        %1928 = vmatpush.bf16.msra.mxu0 %v1721
        %1929 = vmatpush.bf16.msra.mxu0 %v1719
        %1930 = vmatpush.bf16.msra.mxu0 %v1717
        %1931 = vmatpush.bf16.msra.mxu0 %v1715
        %1932 = vmatpush.bf16.msra.mxu0 %v1713
        %1933 = vmatmul.bf16.gmra.mxu0 %v369
        %v1934 = vpop.f32.mrf.mxu0
        %v1935 = vadd.f32 %v1916, %v1934
        %v1936 = vpop.f32.mrf.mxu0
        %v1937 = vadd.f32 %v1918, %v1936
        %1938 = vmatmul.bf16.gmra.mxu0 %v373
        %v1939 = vpop.f32.mrf.mxu0
        %v1940 = vadd.f32 %v1921, %v1939
        %v1941 = vpop.f32.mrf.mxu0
        %v1942 = vadd.f32 %v1923, %v1941
        %1943 = vdwg.mxu0
        %1944 = vst [vmem:[#allocation2 + $0x80] sm:$0xff] %v1859
        %1945 = vst [vmem:[#allocation2 + $0x88] sm:$0xff] %v1935
        %1946 = vst [vmem:[#allocation2 + $0x90] sm:$0xff] %v1861
        %1947 = vst [vmem:[#allocation2 + $0x98] sm:$0xff] %v1937
        %1948 = vst [vmem:[#allocation2 + $0xa0] sm:$0xff] %v1864
        %1949 = vst [vmem:[#allocation2 + $0xa8] sm:$0xff] %v1940
        %1950 = vst [vmem:[#allocation2 + $0xb0] sm:$0xff] %v1866
        %1951 = vst [vmem:[#allocation2 + $0xb8] sm:$0xff] %v1942
        %v1952 = vld [vmem:[#allocation3] sm:$0xff]
        %v1953 = vld [vmem:[#allocation3 + $0x8] sm:$0xff]
        %v1954 = vld [vmem:[#allocation3 + $0x10] sm:$0xff]
        %v1955 = vld [vmem:[#allocation3 + $0x18] sm:$0xff]
        %v1956 = vld [vmem:[#allocation3 + $0x20] sm:$0xff]
        %v1957 = vld [vmem:[#allocation3 + $0x28] sm:$0xff]
        %v1958 = vld [vmem:[#allocation3 + $0x30] sm:$0xff]
        %v1959 = vld [vmem:[#allocation3 + $0x38] sm:$0xff]
        %v1960 = vld [vmem:[#allocation2] sm:$0xff]
        %v1961 = vld [vmem:[#allocation2 + $0x8] sm:$0xff]
        %v1962 = vld [vmem:[#allocation2 + $0x10] sm:$0xff]
        %v1963 = vld [vmem:[#allocation2 + $0x18] sm:$0xff]
        %v1964 = vld [vmem:[#allocation2 + $0x20] sm:$0xff]
        %v1965 = vld [vmem:[#allocation2 + $0x28] sm:$0xff]
        %v1966 = vld [vmem:[#allocation2 + $0x30] sm:$0xff]
        %v1967 = vld [vmem:[#allocation2 + $0x38] sm:$0xff]
        %v1968 = vld [vmem:[#allocation2 + $0x40] sm:$0xff]
        %v1969 = vld [vmem:[#allocation2 + $0x48] sm:$0xff]
        %v1970 = vld [vmem:[#allocation2 + $0x50] sm:$0xff]
        %v1971 = vld [vmem:[#allocation2 + $0x58] sm:$0xff]
        %v1972 = vld [vmem:[#allocation2 + $0x60] sm:$0xff]
        %v1973 = vld [vmem:[#allocation2 + $0x68] sm:$0xff]
        %v1974 = vld [vmem:[#allocation2 + $0x70] sm:$0xff]
        %v1975 = vld [vmem:[#allocation2 + $0x78] sm:$0xff]
        %v1976 = vld [vmem:[#allocation2 + $0x80] sm:$0xff]
        %v1977 = vld [vmem:[#allocation2 + $0x88] sm:$0xff]
        %v1978 = vld [vmem:[#allocation2 + $0x90] sm:$0xff]
        %v1979 = vld [vmem:[#allocation2 + $0x98] sm:$0xff]
        %v1980 = vld [vmem:[#allocation2 + $0xa0] sm:$0xff]
        %v1981 = vld [vmem:[#allocation2 + $0xa8] sm:$0xff]
        %v1982 = vld [vmem:[#allocation2 + $0xb0] sm:$0xff]
        %v1983 = vld [vmem:[#allocation2 + $0xb8] sm:$0xff]
        %v1984 = vld [vmem:[%s237] sm:$0x3]
        %v1986 = vperm.slane %v1984, 0
        %v1987 = vperm.slane %v1984, 1
        %vm1990 = vcmask 785408
        %v1992 = vsel %vm1990, %v1952, 0
        %v1995 = vsel %vm1990, %v1953, 0
        %v1998 = vsel %vm1990, %v1954, 0
        %v2001 = vsel %vm1990, %v1955, 0
        %v2004 = vsel %vm1990, %v1956, 0
        %v2007 = vsel %vm1990, %v1957, 0
        %v2010 = vsel %vm1990, %v1958, 0
        %v2013 = vsel %vm1990, %v1959, 0
        %2015 = vmatpush.msra.mxu0 0.0
        %2016 = vmatpush.msra.mxu0 0.0
        %2017 = vmatpush.msra.mxu0 0.0
        %2018 = vmatpush.msra.mxu0 0.0
        %2019 = vmatpush.msra.mxu0 %v1982
        %2020 = vmatpush.msra.mxu0 %v1980
        %2021 = vmatpush.msra.mxu0 %v1978
        %2022 = vmatpush.msra.mxu0 %v1976
        %2023 = vmatpush.msra.mxu0 %v1974
        %2024 = vmatpush.msra.mxu0 %v1972
        %2025 = vmatpush.msra.mxu0 %v1970
        %2026 = vmatpush.msra.mxu0 %v1968
        %2027 = vmatpush.msra.mxu0 %v1966
        %2028 = vmatpush.msra.mxu0 %v1964
        %2029 = vmatpush.msra.mxu0 %v1962
        %2030 = vmatpush.msra.mxu0 %v1960
        %2031 = vmatmul.f32.gmra.mxu0 %v1992
        %v2032 = vpop.f32.mrf.mxu0
        %v2033 = vadd.f32 %v1986, %v2032
        %2034 = vmatmul.f32.gmra.mxu0 %v1995
        %v2035 = vpop.f32.mrf.mxu0
        %v2036 = vadd.f32 %v1986, %v2035
        %2037 = vmatmul.f32.gmra.mxu0 %v1998
        %v2038 = vpop.f32.mrf.mxu0
        %v2039 = vadd.f32 %v1986, %v2038
        %2040 = vmatmul.f32.gmra.mxu0 %v2001
        %v2041 = vpop.f32.mrf.mxu0
        %v2042 = vadd.f32 %v1986, %v2041
        %2043 = vmatmul.f32.gmra.mxu0 %v2004
        %v2044 = vpop.f32.mrf.mxu0
        %v2045 = vadd.f32 %v1986, %v2044
        %2046 = vmatmul.f32.gmra.mxu0 %v2007
        %v2047 = vpop.f32.mrf.mxu0
        %v2048 = vadd.f32 %v1986, %v2047
        %2049 = vmatmul.f32.gmra.mxu0 %v2010
        %v2050 = vpop.f32.mrf.mxu0
        %v2051 = vadd.f32 %v1986, %v2050
        %2052 = vmatmul.f32.gmra.mxu0 %v2013
        %v2053 = vpop.f32.mrf.mxu0
        %v2054 = vadd.f32 %v1986, %v2053
        %2055 = vdwg.mxu0
        %2056 = vmatpush.msra.mxu0 0.0
        %2057 = vmatpush.msra.mxu0 0.0
        %2058 = vmatpush.msra.mxu0 0.0
        %2059 = vmatpush.msra.mxu0 0.0
        %2060 = vmatpush.msra.mxu0 %v1983
        %2061 = vmatpush.msra.mxu0 %v1981
        %2062 = vmatpush.msra.mxu0 %v1979
        %2063 = vmatpush.msra.mxu0 %v1977
        %2064 = vmatpush.msra.mxu0 %v1975
        %2065 = vmatpush.msra.mxu0 %v1973
        %2066 = vmatpush.msra.mxu0 %v1971
        %2067 = vmatpush.msra.mxu0 %v1969
        %2068 = vmatpush.msra.mxu0 %v1967
        %2069 = vmatpush.msra.mxu0 %v1965
        %2070 = vmatpush.msra.mxu0 %v1963
        %2071 = vmatpush.msra.mxu0 %v1961
        %2072 = vmatmul.f32.gmra.mxu0 %v1992
        %v2073 = vpop.f32.mrf.mxu0
        %v2074 = vadd.f32 %v1987, %v2073
        %2075 = vmatmul.f32.gmra.mxu0 %v1995
        %v2076 = vpop.f32.mrf.mxu0
        %v2077 = vadd.f32 %v1987, %v2076
        %2078 = vmatmul.f32.gmra.mxu0 %v1998
        %v2079 = vpop.f32.mrf.mxu0
        %v2080 = vadd.f32 %v1987, %v2079
        %2081 = vmatmul.f32.gmra.mxu0 %v2001
        %v2082 = vpop.f32.mrf.mxu0
        %v2083 = vadd.f32 %v1987, %v2082
        %2084 = vmatmul.f32.gmra.mxu0 %v2004
        %v2085 = vpop.f32.mrf.mxu0
        %v2086 = vadd.f32 %v1987, %v2085
        %2087 = vmatmul.f32.gmra.mxu0 %v2007
        %v2088 = vpop.f32.mrf.mxu0
        %v2089 = vadd.f32 %v1987, %v2088
        %2090 = vmatmul.f32.gmra.mxu0 %v2010
        %v2091 = vpop.f32.mrf.mxu0
        %v2092 = vadd.f32 %v1987, %v2091
        %2093 = vmatmul.f32.gmra.mxu0 %v2013
        %v2094 = vpop.f32.mrf.mxu0
        %v2095 = vadd.f32 %v1987, %v2094
        %2096 = vdwg.mxu0
        %2097 = vst [vmem:[%s266] sm:$0xff] %v2033
        %2098 = vst [vmem:[%s266 + $0x8] sm:$0xff] %v2074
        %2099 = vst [vmem:[%s266 + $0x10] sm:$0xff] %v2036
        %2100 = vst [vmem:[%s266 + $0x18] sm:$0xff] %v2077
        %2101 = vst [vmem:[%s266 + $0x20] sm:$0xff] %v2039
        %2102 = vst [vmem:[%s266 + $0x28] sm:$0xff] %v2080
        %2103 = vst [vmem:[%s266 + $0x30] sm:$0xff] %v2042
        %2104 = vst [vmem:[%s266 + $0x38] sm:$0xff] %v2083
        %2105 = vst [vmem:[%s266 + $0x40] sm:$0xff] %v2045
        %2106 = vst [vmem:[%s266 + $0x48] sm:$0xff] %v2086
        %2107 = vst [vmem:[%s266 + $0x50] sm:$0xff] %v2048
        %2108 = vst [vmem:[%s266 + $0x58] sm:$0xff] %v2089
        %2109 = vst [vmem:[%s266 + $0x60] sm:$0xff] %v2051
        %2110 = vst [vmem:[%s266 + $0x68] sm:$0xff] %v2092
        %2111 = vst [vmem:[%s266 + $0x70] sm:$0xff] %v2054
        %2112 = vst [vmem:[%s266 + $0x78] sm:$0xff] %v2095
        %s2113 = sand.u32 %s121, 1
        %s2114 = sand.u32 %s121, 1
        %s2115 = smul.addr %s2114, 128
        %s2116 = scalar_lea.vmem [#allocation8], %s2115
        // Predicated region
        $region49: #{upsample_forward.1} parent=35 // pred_check
          %p2117 = pneg %p131
        $region50: #{upsample_forward.1} parent=35 // pred_check_branch
          %2119 = sbr.rel (%p2117) target = $region52
        $region51: #{upsample_forward.1} parent=35 // pred_region
          %s2120 = smul.u32 2, %s19
          %s2121 = smul.addr %s2120, 8
          %s2122 = scalar_lea.vmem %s4, %s2121
          // Predicated region
          $region53: #{upsample_forward.1} parent=51 // pred_check
            _
          $region54: #{upsample_forward.1} parent=51 // pred_check_branch
            %2124 = sbr.rel (0) target = $region56
          $region55: #{upsample_forward.1} parent=51 // pred_region
            // Predicated region
            $region57: #{upsample_forward.1} parent=55 // pred_check
              _
            $region58: #{upsample_forward.1} parent=55 // pred_check_branch
              %2126 = sbr.rel (0) target = $region60
            $region59: #{upsample_forward.1} parent=55 // pred_region
              loop: start=0, step=1, limit=1
              $region61: #{upsample_forward.1} parent=59 // loop_pre_header
                _
              $region62: #{upsample_forward.1} parent=59 // loop_header
                %s2128 = sphi 0, %s2132
                %p2129 = scmp.ge.s32.totalorder %s2128, 1
                %s2133 = sphi %s2116, %s2116
                %s2134 = sphi %s2122, %s2122
              $region63: #{upsample_forward.1} parent=59 // loop_header_branch
                %2131 = sbr.rel (%p2129) target = $region67
              $region64: #{upsample_forward.1} parent=59 // loop_body
                %v2135 = vld [vmem:[%s2133] sm:$0xff]
                %2136 = vst [vmem:[%s2134] sm:$0xff] %v2135
                %v2137 = vld [vmem:[%s2133 + $0x8] sm:$0xff]
                %2138 = vst [vmem:[%s2134 + $0x8] sm:$0xff] %v2137
                %v2139 = vld [vmem:[%s2133 + $0x10] sm:$0xff]
                %2140 = vst [vmem:[%s2134 + $0x20] sm:$0xff] %v2139
                %v2141 = vld [vmem:[%s2133 + $0x18] sm:$0xff]
                %2142 = vst [vmem:[%s2134 + $0x28] sm:$0xff] %v2141
                %v2143 = vld [vmem:[%s2133 + $0x20] sm:$0xff]
                %2144 = vst [vmem:[%s2134 + $0x40] sm:$0xff] %v2143
                %v2145 = vld [vmem:[%s2133 + $0x28] sm:$0xff]
                %2146 = vst [vmem:[%s2134 + $0x48] sm:$0xff] %v2145
                %v2147 = vld [vmem:[%s2133 + $0x30] sm:$0xff]
                %2148 = vst [vmem:[%s2134 + $0x60] sm:$0xff] %v2147
                %v2149 = vld [vmem:[%s2133 + $0x38] sm:$0xff]
                %2150 = vst [vmem:[%s2134 + $0x68] sm:$0xff] %v2149
                %v2151 = vld [vmem:[%s2133 + $0x40] sm:$0xff]
                %2152 = vst [vmem:[%s2134 + $0x80] sm:$0xff] %v2151
                %v2153 = vld [vmem:[%s2133 + $0x48] sm:$0xff]
                %2154 = vst [vmem:[%s2134 + $0x88] sm:$0xff] %v2153
                %v2155 = vld [vmem:[%s2133 + $0x50] sm:$0xff]
                %2156 = vst [vmem:[%s2134 + $0xa0] sm:$0xff] %v2155
                %v2157 = vld [vmem:[%s2133 + $0x58] sm:$0xff]
                %2158 = vst [vmem:[%s2134 + $0xa8] sm:$0xff] %v2157
                %v2159 = vld [vmem:[%s2133 + $0x60] sm:$0xff]
                %2160 = vst [vmem:[%s2134 + $0xc0] sm:$0xff] %v2159
                %v2161 = vld [vmem:[%s2133 + $0x68] sm:$0xff]
                %2162 = vst [vmem:[%s2134 + $0xc8] sm:$0xff] %v2161
                %v2163 = vld [vmem:[%s2133 + $0x70] sm:$0xff]
                %2164 = vst [vmem:[%s2134 + $0xe0] sm:$0xff] %v2163
                %v2165 = vld [vmem:[%s2133 + $0x78] sm:$0xff]
                %2166 = vst [vmem:[%s2134 + $0xe8] sm:$0xff] %v2165
              $region65: #{upsample_forward.1} parent=59 // loop_footer
                %s2132 = sadd.s32 1, %s2128
              $region66: #{upsample_forward.1} parent=59 // loop_footer_branch
                %2127 = sbr.rel target = $region62
              $region67: #{upsample_forward.1} parent=59 // loop_exit
                _
            $region60: #{upsample_forward.1} parent=55 // pred_fallthru
              _
            // Predicated region
            $region68: #{upsample_forward.1} parent=55 // pred_check
              _
            $region69: #{upsample_forward.1} parent=55 // pred_check_branch
              %2168 = sbr.rel target = $region71
            $region70: #{upsample_forward.1} parent=55 // pred_region
              _
            $region71: #{upsample_forward.1} parent=55 // pred_fallthru
              _
          $region56: #{upsample_forward.1} parent=51 // pred_fallthru
            _
          %2169 = vnop
        $region52: #{upsample_forward.1} parent=35 // pred_fallthru
          _
      $region36: #{upsample_forward.1} parent=5 // pred_fallthru
        _
      %p2170 = scmp.le.s32.totalorder 2, %s14
      // Predicated region
      $region72: #{upsample_forward.1} parent=5 // pred_check
        %p2171 = pneg %p2170
      $region73: #{upsample_forward.1} parent=5 // pred_check_branch
        %2173 = sbr.rel (%p2171) target = $region75
      $region74: #{upsample_forward.1} parent=5 // pred_region
        %s2174 = ssub.s32 %s14, 2
        // Predicated region
        $region76: #{upsample_forward.1} parent=74 // pred_check
          %p2175 = pneg %p137
        $region77: #{upsample_forward.1} parent=74 // pred_check_branch
          %2177 = sbr.rel (%p2175) target = $region79
        $region78: #{upsample_forward.1} parent=74 // pred_region
          %s2178 = sand.u32 %s122, 1
          %s2179 = sand.u32 %s122, 1
          %s2180 = smul.addr %s2179, 128
          %s2181 = scalar_lea.vmem [#allocation8], %s2180
        $region79: #{upsample_forward.1} parent=74 // pred_fallthru
          _
      $region75: #{upsample_forward.1} parent=5 // pred_fallthru
        _
    $region6: #{upsample_forward.1} parent=1 // loop_footer
      %s18 = sadd.s32 1, %s14
    $region7: #{upsample_forward.1} parent=1 // loop_footer_branch
      %13 = sbr.rel target = $region3
    $region8: #{upsample_forward.1} parent=1 // loop_exit
      _
    %2182 = vsyncpa [#allocation4], 1
    %s2183 = scalar_lea.sflag [#allocation4], 1
    %2184 = vsyncpa %s2183, 1
    %2185 = vsyncpa [#allocation6], 1
    %s2186 = scalar_lea.sflag [#allocation6], 1
    %2187 = vsyncpa %s2186, 1

</llo_original>
